<compile_context>
chip_gen: v7x
topology: tpu7x:2x2x1
jax: 0.10.0
libtpu: 0.0.40
codegen_flags: <defaults>
</compile_context>

<pallas_src>
import math
import functools

import jax
import jax.numpy as jnp
from jax.experimental import pallas as pl
from jax.experimental.pallas import tpu as pltpu


_FUSE_TAPS_MAX_K_CIN = 2048  # cap on the fused contraction size


def _round_up(x, m):
    return ((x + m - 1) // m) * m


def _mxu_contraction_width():
    """Best-effort MXU contraction width (128 on v5e, 256 on v6e/v7x)."""
    try:
        info = pltpu.get_tpu_info()
    except Exception:
        return 256
    for name in ("mxu_contracting_size", "mxu_column_count", "mxu_width",
                 "matmul_unit_width"):
        v = getattr(info, name, None)
        if isinstance(v, int) and v > 0:
            return int(v)
    return 256


def _conv_bn_act_kernel(prev_ref, x_ref, next_ref, w_ref, scale_ref, bias_ref,
                        out_ref, xslab_ref, *, kernel_size, tile_t, t_true,
                        apply_tanh, fuse_taps):
    """One (batch, time-tile) step: conv1d (same pad) + folded BN + tanh.

    prev_ref  : (1, 8, Cin)        8-row block just before this tile (halo)
    x_ref     : (1, TILE_T, Cin)   main input tile
    next_ref  : (1, 8, Cin)        8-row block just after this tile (halo)
    w_ref     : (K*Cin, Cout) if fuse_taps else (K, Cin, Cout)   (bf16)
    scale_ref : (1, Cout)          folded BN scale (f32)
    bias_ref  : (1, Cout)          folded BN bias incl. conv bias (f32)
    out_ref   : (1, TILE_T, Cout)  (bf16)
    xslab_ref : (TILE_T + 16, Cin) VMEM scratch (bf16), main tile at row 8
    """
    K = kernel_size
    pad = (K - 1) // 2
    TT = tile_t
    i = pl.program_id(1)

    # --- assemble the padded time window in a sublane-aligned scratch -------
    # rows [0:8)          : prev halo block  (represents global rows i*TT-8..)
    # rows [8:8+TT)       : main tile        (rows >= t_true are already 0)
    # rows [8+TT:TT+16)   : next halo block  (represents rows (i+1)*TT..)
    r8 = jax.lax.broadcasted_iota(jnp.int32, (8, 1), 0)
    prev = prev_ref[0]
    prev = jnp.where(r8 + (i * TT - 8) >= 0, prev, jnp.zeros_like(prev))
    nxt = next_ref[0]
    nxt = jnp.where(r8 + (i + 1) * TT < t_true, nxt, jnp.zeros_like(nxt))
    xslab_ref[0:8, :] = prev
    xslab_ref[8:8 + TT, :] = x_ref[0]
    xslab_ref[8 + TT:TT + 16, :] = nxt

    # --- convolution as matmuls over the channel (lane) axis ----------------
    if fuse_taps:
        # Small contraction: fuse the K taps into one (TT, K*Cin) @ (K*Cin, Cout)
        # matmul to fill the MXU contraction dimension.
        slab = jnp.concatenate(
            [xslab_ref[8 - pad + k:8 - pad + k + TT, :] for k in range(K)],
            axis=1)
        acc = jnp.dot(slab, w_ref[...], preferred_element_type=jnp.float32)
    else:
        # Large contraction: unrolled per-tap matmuls, accumulator initialized
        # from the first tap (no zero-fill).
        acc = jnp.dot(xslab_ref[8 - pad:8 - pad + TT, :], w_ref[0],
                      preferred_element_type=jnp.float32)
        for k in range(1, K):
            acc = acc + jnp.dot(xslab_ref[8 - pad + k:8 - pad + k + TT, :],
                                w_ref[k], preferred_element_type=jnp.float32)

    y = acc * scale_ref[...] + bias_ref[...]
    if apply_tanh:
        y = jnp.tanh(y)

    # --- store; only the single partial tile pays a full-tile mask ----------
    @pl.when((i + 1) * TT <= t_true)
    def _():
        out_ref[0, :, :] = y.astype(out_ref.dtype)

    @pl.when((i + 1) * TT > t_true)
    def _():
        rows = jax.lax.broadcasted_iota(jnp.int32, (TT, 1), 0)
        keep = rows + i * TT < t_true
        out_ref[0, :, :] = jnp.where(keep, y, 0.0).astype(out_ref.dtype)


def conv_bn_act(x_btc, weight, scale, bias, *, apply_tanh, time_tile, t_true):
    """x_btc: (B, T_pad, Cin) bf16, T_pad a multiple of time_tile, Cin/Cout
    padded to multiples of 128. weight: (K, Cin, Cout) bf16. Returns
    (B, T_pad, Cout) bf16 with rows >= t_true zeroed."""
    B, t_pad, c_in = x_btc.shape
    K, _, c_out = weight.shape
    TT = time_tile
    pad = (K - 1) // 2
    assert TT % 8 == 0 and t_pad % TT == 0
    assert pad <= 8, "halo larger than one 8-row block is not supported"
    n_t = t_pad // TT
    r_blk = TT // 8           # main-tile size in units of 8-row blocks
    n8 = t_pad // 8           # number of 8-row blocks along time

    # MXU-width-aware tap fusion: only fuse when the per-tap contraction
    # (padded Cin) underfills the MXU (never on v5e's 128-wide MXU).
    fuse_taps = (c_in < _mxu_contraction_width()
                 and (K * c_in) <= _FUSE_TAPS_MAX_K_CIN)
    if fuse_taps:
        w_arg = weight.reshape(K * c_in, c_out)
        w_shape = (K * c_in, c_out)
        w_map = lambda b, i: (0, 0)
    else:
        w_arg = weight
        w_shape = (K, c_in, c_out)
        w_map = lambda b, i: (0, 0, 0)

    kernel = functools.partial(
        _conv_bn_act_kernel, kernel_size=K, tile_t=TT, t_true=t_true,
        apply_tanh=apply_tanh, fuse_taps=fuse_taps)

    def run(const_buffer_count):
        if const_buffer_count is None:
            const_kwargs = {}
        else:
            const_kwargs = dict(pipeline_mode=pl.Buffered(const_buffer_count))
        in_specs = [
            # 8-row halo block just before the tile (clamped at the start).
            pl.BlockSpec((1, 8, c_in),
                         lambda b, i: (b, jnp.maximum(i * r_blk - 1, 0), 0)),
            # main time tile
            pl.BlockSpec((1, TT, c_in), lambda b, i: (b, i, 0)),
            # 8-row halo block just after the tile (clamped at the end).
            pl.BlockSpec((1, 8, c_in),
                         lambda b, i: (b, jnp.minimum((i + 1) * r_blk,
                                                      n8 - 1), 0)),
            pl.BlockSpec(w_shape, w_map, **const_kwargs),
            pl.BlockSpec((1, c_out), lambda b, i: (0, 0), **const_kwargs),
            pl.BlockSpec((1, c_out), lambda b, i: (0, 0), **const_kwargs),
        ]
        return pl.pallas_call(
            kernel,
            out_shape=jax.ShapeDtypeStruct((B, t_pad, c_out), jnp.bfloat16),
            grid_spec=pltpu.PrefetchScalarGridSpec(
                num_scalar_prefetch=0,
                grid=(B, n_t),
                in_specs=in_specs,
                out_specs=pl.BlockSpec((1, TT, c_out), lambda b, i: (b, i, 0)),
                scratch_shapes=[pltpu.VMEM((TT + 16, c_in), jnp.bfloat16)]),
            compiler_params=pltpu.CompilerParams(
                dimension_semantics=("parallel", "parallel"),
                vmem_limit_bytes=32 * 1024 * 1024),
        )(x_btc, x_btc, x_btc, w_arg, scale, bias)

    try:
        # Constant-index operands are fetched once; single-buffering them
        # halves their VMEM reservation (frees room for larger time tiles).
        return run(1)
    except Exception:
        # Backend rejected pipeline_mode — fall back to default buffering.
        return run(None)


def make_postnet_params(key, n_mel_channels, postnet_embedding_dim,
                        postnet_kernel_size, postnet_n_convolutions):
    """Xavier-uniform conv weights (PyTorch gains), zero conv bias, BN gamma=1
    beta=0 with synthetic running stats, folded to scale/bias. Weights are
    stored bf16 and channel-padded to multiples of 128."""
    layers = []
    dims = ([(n_mel_channels, postnet_embedding_dim)]
            + [(postnet_embedding_dim, postnet_embedding_dim)]
            * (postnet_n_convolutions - 2)
            + [(postnet_embedding_dim, n_mel_channels)])
    gains = [5.0 / 3.0] * (postnet_n_convolutions - 1) + [1.0]  # tanh, linear
    K = postnet_kernel_size
    eps = 1e-5
    for (c_in, c_out), gain in zip(dims, gains):
        key, k_w, k_m, k_v = jax.random.split(key, 4)
        fan_in = c_in * K
        fan_out = c_out * K
        limit = gain * math.sqrt(6.0 / (fan_in + fan_out))
        # PyTorch Conv1d weight is (Cout, Cin, K); store as (K, Cin, Cout).
        w = jax.random.uniform(k_w, (K, c_in, c_out), jnp.float32,
                               minval=-limit, maxval=limit)
        conv_b = jnp.zeros((c_out,), jnp.float32)
        gamma = jnp.ones((c_out,), jnp.float32)
        beta = jnp.zeros((c_out,), jnp.float32)
        running_mean = 0.1 * jax.random.normal(k_m, (c_out,), jnp.float32)
        running_var = 1.0 + 0.1 * jax.random.uniform(k_v, (c_out,), jnp.float32)
        # Fold BN (eval mode) and conv bias into per-channel scale/bias.
        scale = gamma / jnp.sqrt(running_var + eps)
        bias = (conv_b - running_mean) * scale + beta
        c_in_p = _round_up(c_in, 128)
        c_out_p = _round_up(c_out, 128)
        w_p = jnp.zeros((K, c_in_p, c_out_p), jnp.float32)
        w_p = w_p.at[:, :c_in, :c_out].set(w)
        scale_p = jnp.zeros((c_out_p,), jnp.float32).at[:c_out].set(scale)
        bias_p = jnp.zeros((c_out_p,), jnp.float32).at[:c_out].set(bias)
        layers.append(dict(weight=w_p.astype(jnp.bfloat16),
                           scale=scale_p.reshape(1, c_out_p),
                           bias=bias_p.reshape(1, c_out_p),
                           c_in=c_in, c_out=c_out))
    return layers


def postnet_forward(x_ncl, layers, *, time_tile=512):
    """x_ncl: (B, n_mel, T) like the PyTorch module. Returns (B, n_mel, T) f32."""
    B, c0, T = x_ncl.shape
    x = jnp.transpose(x_ncl, (0, 2, 1))                 # (B, T, C)
    TT = min(_round_up(time_tile, 8), _round_up(T, 8))  # tile of the time axis
    t_pad = _round_up(T, TT)
    c_in_p = layers[0]["weight"].shape[1]
    # One-time pad of the (small) mel-channel input; all inter-layer halo /
    # tail handling is done in-kernel (no per-layer HBM padding).
    x = jnp.pad(x, ((0, 0), (0, t_pad - T), (0, c_in_p - c0)))
    x = x.astype(jnp.bfloat16)
    n_layers = len(layers)
    for idx, p in enumerate(layers):
        apply_tanh = idx < n_layers - 1
        x = conv_bn_act(x, p["weight"], p["scale"], p["bias"],
                        apply_tanh=apply_tanh, time_tile=TT, t_true=T)
        # dropout(p=0.5, training=False) == identity
    c_out = layers[-1]["c_out"]
    y = x[:, :T, :c_out].astype(jnp.float32)
    return jnp.transpose(y, (0, 2, 1))                  # back to (B, C, T)


def postnet_reference(x_ncl, layers):
    """Plain-JAX reference with the same bf16 rounding points as the kernel."""
    B, c0, T = x_ncl.shape
    c_in_p = layers[0]["weight"].shape[1]
    x = jnp.transpose(x_ncl, (0, 2, 1))
    x = jnp.pad(x, ((0, 0), (0, 0), (0, c_in_p - c0))).astype(jnp.bfloat16)
    n_layers = len(layers)
    for idx, p in enumerate(layers):
        w = p["weight"]                      # bf16, (K, Cin_p, Cout_p)
        K = w.shape[0]
        pad = (K - 1) // 2
        xp = jnp.pad(x, ((0, 0), (pad, pad), (0, 0)))
        y = jnp.zeros((x.shape[0], T, w.shape[2]), jnp.float32)
        for k in range(K):
            y = y + jnp.einsum("btc,cd->btd", xp[:, k:k + T, :], w[k],
                               preferred_element_type=jnp.float32)
        y = y * p["scale"][None] + p["bias"][None]
        if idx < n_layers - 1:
            y = jnp.tanh(y)
        x = y.astype(jnp.bfloat16)
    c_out = layers[-1]["c_out"]
    y = x[:, :, :c_out].astype(jnp.float32)
    return jnp.transpose(y, (0, 2, 1))


if __name__ == "__main__":
    # Small shapes consistent with the module's forward. The embedding dim is
    # chosen so both kernel paths (fused-tap matmul for small Cin, per-tap
    # loop for larger Cin) and the halo/tail masking (T not a multiple of the
    # time tile) are exercised.
    n_mel_channels = 16
    postnet_embedding_dim = 160
    postnet_kernel_size = 5
    postnet_n_convolutions = 3
    batch = 2
    seq = 40
    time_tile = 16

    key = jax.random.PRNGKey(0)
    key, k_x = jax.random.split(key)
    x = jax.random.normal(k_x, (batch, n_mel_channels, seq), jnp.float32)

    layers = make_postnet_params(key, n_mel_channels, postnet_embedding_dim,
                                 postnet_kernel_size, postnet_n_convolutions)

    out = postnet_forward(x, layers, time_tile=time_tile)
    out = jax.block_until_ready(out)

    ref = postnet_reference(x, layers)
    assert out.shape == (batch, n_mel_channels, seq)
    assert jnp.allclose(out, ref, atol=2e-2, rtol=2e-2), "mismatch vs reference"

    print("KERNEL_OK")
</pallas_src>

<mosaic_0001>
module attributes {stable_mosaic.version = 11 : i64} {
  func.func @_conv_bn_act_kernel(%arg0: i32, %arg1: i32, %arg2: memref<1x8x128xbf16, #tpu.memory_space<vmem>>, %arg3: memref<1x16x128xbf16, #tpu.memory_space<vmem>>, %arg4: memref<1x8x128xbf16, #tpu.memory_space<vmem>>, %arg5: memref<640x256xbf16, #tpu.memory_space<vmem>>, %arg6: memref<1x256xf32, #tpu.memory_space<vmem>>, %arg7: memref<1x256xf32, #tpu.memory_space<vmem>>, %arg8: memref<1x16x256xbf16, #tpu.memory_space<vmem>>, %arg9: memref<32x128xbf16, #tpu.memory_space<vmem>>) attributes {dimension_semantics = [#tpu.dimension_semantics<parallel>, #tpu.dimension_semantics<parallel>], iteration_bounds = array<i64: 2, 3>, scalar_prefetch = 0 : i64, scratch_operands = 1 : i64, tpu.core_type = #tpu.core_type<tc>, window_params = [{transform_indices = @transform_0, window_bounds = array<i64: 1, 8, 128>}, {transform_indices = @transform_1, window_bounds = array<i64: 1, 16, 128>}, {transform_indices = @transform_2, window_bounds = array<i64: 1, 8, 128>}, {pipeline_mode = #tpu.pipeline_mode<synchronous>, transform_indices = @transform_3, window_bounds = array<i64: 640, 256>}, {pipeline_mode = #tpu.pipeline_mode<synchronous>, transform_indices = @transform_4, window_bounds = array<i64: 1, 256>}, {pipeline_mode = #tpu.pipeline_mode<synchronous>, transform_indices = @transform_5, window_bounds = array<i64: 1, 256>}, {transform_indices = @transform_6, window_bounds = array<i64: 1, 16, 256>}]} {
    %0 = tpu.iota {dimensions = array<i32: 0>} : vector<8x1xi32>
    %c0 = arith.constant 0 : index
    %c0_0 = arith.constant 0 : index
    %c0_1 = arith.constant 0 : index
    %1 = vector.load %arg2[%c0, %c0_0, %c0_1] : memref<1x8x128xbf16, #tpu.memory_space<vmem>>, vector<1x8x128xbf16>
    %2 = vector.shape_cast %1 : vector<1x8x128xbf16> to vector<8x128xbf16>
    %c16_i32 = arith.constant 16 : i32
    %3 = arith.muli %arg1, %c16_i32 : i32
    %c8_i32 = arith.constant 8 : i32
    %4 = arith.subi %3, %c8_i32 : i32
    %5 = vector.broadcast %4 : i32 to vector<8x1xi32>
    %6 = arith.addi %0, %5 : vector<8x1xi32>
    %c0_i32 = arith.constant 0 : i32
    %7 = vector.broadcast %c0_i32 : i32 to vector<8x1xi32>
    %8 = arith.cmpi sge, %6, %7 : vector<8x1xi32>
    %cst = arith.constant 0.000000e+00 : bf16
    %9 = vector.broadcast %cst : bf16 to vector<8x128xbf16>
    %10 = vector.shape_cast %8 : vector<8x1xi1> to vector<8x1xi1>
    %11 = vector.broadcast %10 : vector<8x1xi1> to vector<8x128xi1>
    %12 = arith.select %11, %2, %9 : vector<8x128xi1>, vector<8x128xbf16>
    %c0_2 = arith.constant 0 : index
    %c0_3 = arith.constant 0 : index
    %c0_4 = arith.constant 0 : index
    %13 = vector.load %arg4[%c0_2, %c0_3, %c0_4] : memref<1x8x128xbf16, #tpu.memory_space<vmem>>, vector<1x8x128xbf16>
    %14 = vector.shape_cast %13 : vector<1x8x128xbf16> to vector<8x128xbf16>
    %c1_i32 = arith.constant 1 : i32
    %15 = arith.addi %arg1, %c1_i32 : i32
    %c16_i32_5 = arith.constant 16 : i32
    %16 = arith.muli %15, %c16_i32_5 : i32
    %17 = vector.broadcast %16 : i32 to vector<8x1xi32>
    %18 = arith.addi %0, %17 : vector<8x1xi32>
    %c40_i32 = arith.constant 40 : i32
    %19 = vector.broadcast %c40_i32 : i32 to vector<8x1xi32>
    %20 = arith.cmpi slt, %18, %19 : vector<8x1xi32>
    %cst_6 = arith.constant 0.000000e+00 : bf16
    %21 = vector.broadcast %cst_6 : bf16 to vector<8x128xbf16>
    %22 = vector.shape_cast %20 : vector<8x1xi1> to vector<8x1xi1>
    %23 = vector.broadcast %22 : vector<8x1xi1> to vector<8x128xi1>
    %24 = arith.select %23, %14, %21 : vector<8x128xi1>, vector<8x128xbf16>
    %c0_7 = arith.constant 0 : index
    %c0_8 = arith.constant 0 : index
    %25 = vector.load %arg9[%c0_7, %c0_8] : memref<32x128xbf16, #tpu.memory_space<vmem>>, vector<8x128xbf16>
    tpu.vector_store %arg9[%c0_7, %c0_8], %12 {strides = array<i32>} : memref<32x128xbf16, #tpu.memory_space<vmem>>, vector<8x128xbf16>,
    %c0_9 = arith.constant 0 : index
    %c0_10 = arith.constant 0 : index
    %c0_11 = arith.constant 0 : index
    %26 = vector.load %arg3[%c0_9, %c0_10, %c0_11] : memref<1x16x128xbf16, #tpu.memory_space<vmem>>, vector<1x16x128xbf16>
    %27 = vector.shape_cast %26 : vector<1x16x128xbf16> to vector<16x128xbf16>
    %c8 = arith.constant 8 : index
    %c0_12 = arith.constant 0 : index
    %28 = vector.load %arg9[%c8, %c0_12] : memref<32x128xbf16, #tpu.memory_space<vmem>>, vector<16x128xbf16>
    tpu.vector_store %arg9[%c8, %c0_12], %27 {strides = array<i32>} : memref<32x128xbf16, #tpu.memory_space<vmem>>, vector<16x128xbf16>,
    %c24 = arith.constant 24 : index
    %c0_13 = arith.constant 0 : index
    %29 = vector.load %arg9[%c24, %c0_13] : memref<32x128xbf16, #tpu.memory_space<vmem>>, vector<8x128xbf16>
    tpu.vector_store %arg9[%c24, %c0_13], %24 {strides = array<i32>} : memref<32x128xbf16, #tpu.memory_space<vmem>>, vector<8x128xbf16>,
    %c6 = arith.constant 6 : index
    %c0_14 = arith.constant 0 : index
    %30 = vector.load %arg9[%c6, %c0_14] : memref<32x128xbf16, #tpu.memory_space<vmem>>, vector<16x128xbf16>
    %c7 = arith.constant 7 : index
    %c0_15 = arith.constant 0 : index
    %31 = vector.load %arg9[%c7, %c0_15] : memref<32x128xbf16, #tpu.memory_space<vmem>>, vector<16x128xbf16>
    %c8_16 = arith.constant 8 : index
    %c0_17 = arith.constant 0 : index
    %32 = vector.load %arg9[%c8_16, %c0_17] : memref<32x128xbf16, #tpu.memory_space<vmem>>, vector<16x128xbf16>
    %c9 = arith.constant 9 : index
    %c0_18 = arith.constant 0 : index
    %33 = vector.load %arg9[%c9, %c0_18] : memref<32x128xbf16, #tpu.memory_space<vmem>>, vector<16x128xbf16>
    %c10 = arith.constant 10 : index
    %c0_19 = arith.constant 0 : index
    %34 = vector.load %arg9[%c10, %c0_19] : memref<32x128xbf16, #tpu.memory_space<vmem>>, vector<16x128xbf16>
    %35 = tpu.concatenate %30, %31, %32, %33, %34 in 1 : vector<16x128xbf16>, vector<16x128xbf16>, vector<16x128xbf16>, vector<16x128xbf16>, vector<16x128xbf16> -> vector<16x640xbf16>
    %c0_20 = arith.constant 0 : index
    %c0_21 = arith.constant 0 : index
    %36 = vector.load %arg5[%c0_20, %c0_21] : memref<640x256xbf16, #tpu.memory_space<vmem>>, vector<640x256xbf16>
    %cst_22 = arith.constant dense<0.000000e+00> : vector<16x256xf32>
    %37 = tpu.matmul %35, %36, %cst_22 {dimension_numbers = #tpu.dot_dimension_numbers<[1], [0], [0], [1], [0, 0, 1, 1], [], []>} : vector<16x640xbf16>, vector<640x256xbf16>, vector<16x256xf32> -> vector<16x256xf32>
    %c0_23 = arith.constant 0 : index
    %c0_24 = arith.constant 0 : index
    %38 = vector.load %arg6[%c0_23, %c0_24] : memref<1x256xf32, #tpu.memory_space<vmem>>, vector<1x256xf32>
    %39 = vector.broadcast %38 : vector<1x256xf32> to vector<16x256xf32>
    %40 = arith.mulf %37, %39 : vector<16x256xf32>
    %c0_25 = arith.constant 0 : index
    %c0_26 = arith.constant 0 : index
    %41 = vector.load %arg7[%c0_25, %c0_26] : memref<1x256xf32, #tpu.memory_space<vmem>>, vector<1x256xf32>
    %42 = vector.broadcast %41 : vector<1x256xf32> to vector<16x256xf32>
    %43 = arith.addf %40, %42 : vector<16x256xf32>
    %44 = math.tanh %43 : vector<16x256xf32>
    %c1_i32_27 = arith.constant 1 : i32
    %45 = arith.addi %arg1, %c1_i32_27 : i32
    %c16_i32_28 = arith.constant 16 : i32
    %46 = arith.muli %45, %c16_i32_28 : i32
    %c40_i32_29 = arith.constant 40 : i32
    %47 = arith.cmpi sle, %46, %c40_i32_29 : i32
    %48 = arith.extui %47 : i1 to i32
    %c0_i32_30 = arith.constant 0 : i32
    %49 = arith.cmpi ne, %48, %c0_i32_30 : i32
    scf.if %49 {
      %55 = arith.truncf %44 : vector<16x256xf32> to vector<16x256xbf16>
      %c0_35 = arith.constant 0 : index
      %c0_36 = arith.constant 0 : index
      %c0_37 = arith.constant 0 : index
      %56 = vector.load %arg8[%c0_35, %c0_36, %c0_37] : memref<1x16x256xbf16, #tpu.memory_space<vmem>>, vector<1x16x256xbf16>
      %57 = vector.shape_cast %56 : vector<1x16x256xbf16> to vector<16x256xbf16>
      %58 = vector.shape_cast %55 : vector<16x256xbf16> to vector<1x16x256xbf16>
      tpu.vector_store %arg8[%c0_35, %c0_36, %c0_37], %58 {strides = array<i32>} : memref<1x16x256xbf16, #tpu.memory_space<vmem>>, vector<1x16x256xbf16>,
    } else {
    }
    %c1_i32_31 = arith.constant 1 : i32
    %50 = arith.addi %arg1, %c1_i32_31 : i32
    %c16_i32_32 = arith.constant 16 : i32
    %51 = arith.muli %50, %c16_i32_32 : i32
    %c40_i32_33 = arith.constant 40 : i32
    %52 = arith.cmpi sgt, %51, %c40_i32_33 : i32
    %53 = arith.extui %52 : i1 to i32
    %c0_i32_34 = arith.constant 0 : i32
    %54 = arith.cmpi ne, %53, %c0_i32_34 : i32
    scf.if %54 {
      %55 = tpu.iota {dimensions = array<i32: 0>} : vector<16x1xi32>
      %c16_i32_35 = arith.constant 16 : i32
      %56 = arith.muli %arg1, %c16_i32_35 : i32
      %57 = vector.broadcast %56 : i32 to vector<16x1xi32>
      %58 = arith.addi %55, %57 : vector<16x1xi32>
      %c40_i32_36 = arith.constant 40 : i32
      %59 = vector.broadcast %c40_i32_36 : i32 to vector<16x1xi32>
      %60 = arith.cmpi slt, %58, %59 : vector<16x1xi32>
      %cst_37 = arith.constant 0.000000e+00 : f32
      %61 = vector.shape_cast %60 : vector<16x1xi1> to vector<16x1xi1>
      %62 = vector.broadcast %61 : vector<16x1xi1> to vector<16x256xi1>
      %63 = vector.broadcast %cst_37 : f32 to vector<16x256xf32>
      %64 = arith.select %62, %44, %63 : vector<16x256xi1>, vector<16x256xf32>
      %65 = arith.truncf %64 : vector<16x256xf32> to vector<16x256xbf16>
      %c0_38 = arith.constant 0 : index
      %c0_39 = arith.constant 0 : index
      %c0_40 = arith.constant 0 : index
      %66 = vector.load %arg8[%c0_38, %c0_39, %c0_40] : memref<1x16x256xbf16, #tpu.memory_space<vmem>>, vector<1x16x256xbf16>
      %67 = vector.shape_cast %66 : vector<1x16x256xbf16> to vector<16x256xbf16>
      %68 = vector.shape_cast %65 : vector<16x256xbf16> to vector<1x16x256xbf16>
      tpu.vector_store %arg8[%c0_38, %c0_39, %c0_40], %68 {strides = array<i32>} : memref<1x16x256xbf16, #tpu.memory_space<vmem>>, vector<1x16x256xbf16>,
    } else {
    }
    return
  }
  func.func @transform_0(%arg0: i32, %arg1: i32) -> (i32, i32, i32) {
    %c2_i32 = arith.constant 2 : i32
    %0 = arith.muli %arg1, %c2_i32 : i32
    %c1_i32 = arith.constant 1 : i32
    %1 = arith.subi %0, %c1_i32 : i32
    %c0_i32 = arith.constant 0 : i32
    %2 = arith.maxsi %1, %c0_i32 : i32
    %c0_i32_0 = arith.constant 0 : i32
    %c0_i32_1 = arith.constant 0 : i32
    return %arg0, %2, %c0_i32_0 : i32, i32, i32
  }
  func.func @transform_1(%arg0: i32, %arg1: i32) -> (i32, i32, i32) {
    %c0_i32 = arith.constant 0 : i32
    %c0_i32_0 = arith.constant 0 : i32
    return %arg0, %arg1, %c0_i32 : i32, i32, i32
  }
  func.func @transform_2(%arg0: i32, %arg1: i32) -> (i32, i32, i32) {
    %c1_i32 = arith.constant 1 : i32
    %0 = arith.addi %arg1, %c1_i32 : i32
    %c2_i32 = arith.constant 2 : i32
    %1 = arith.muli %0, %c2_i32 : i32
    %c5_i32 = arith.constant 5 : i32
    %2 = arith.minsi %1, %c5_i32 : i32
    %c0_i32 = arith.constant 0 : i32
    %c0_i32_0 = arith.constant 0 : i32
    return %arg0, %2, %c0_i32 : i32, i32, i32
  }
  func.func @transform_3(%arg0: i32, %arg1: i32) -> (i32, i32) {
    %c0_i32 = arith.constant 0 : i32
    %c0_i32_0 = arith.constant 0 : i32
    %c0_i32_1 = arith.constant 0 : i32
    return %c0_i32, %c0_i32_0 : i32, i32
  }
  func.func @transform_4(%arg0: i32, %arg1: i32) -> (i32, i32) {
    %c0_i32 = arith.constant 0 : i32
    %c0_i32_0 = arith.constant 0 : i32
    %c0_i32_1 = arith.constant 0 : i32
    return %c0_i32, %c0_i32_0 : i32, i32
  }
  func.func @transform_5(%arg0: i32, %arg1: i32) -> (i32, i32) {
    %c0_i32 = arith.constant 0 : i32
    %c0_i32_0 = arith.constant 0 : i32
    %c0_i32_1 = arith.constant 0 : i32
    return %c0_i32, %c0_i32_0 : i32, i32
  }
  func.func @transform_6(%arg0: i32, %arg1: i32) -> (i32, i32, i32) {
    %c0_i32 = arith.constant 0 : i32
    %c0_i32_0 = arith.constant 0 : i32
    return %arg0, %arg1, %c0_i32 : i32, i32, i32
  }
}

module attributes {stable_mosaic.version = 11 : i64} {
  func.func @_conv_bn_act_kernel(%arg0: i32, %arg1: i32, %arg2: memref<1x8x128xbf16, #tpu.memory_space<vmem>>, %arg3: memref<1x16x128xbf16, #tpu.memory_space<vmem>>, %arg4: memref<1x8x128xbf16, #tpu.memory_space<vmem>>, %arg5: memref<640x256xbf16, #tpu.memory_space<vmem>>, %arg6: memref<1x256xf32, #tpu.memory_space<vmem>>, %arg7: memref<1x256xf32, #tpu.memory_space<vmem>>, %arg8: memref<1x16x256xbf16, #tpu.memory_space<vmem>>, %arg9: memref<32x128xbf16, #tpu.memory_space<vmem>>) attributes {dimension_semantics = [#tpu.dimension_semantics<parallel>, #tpu.dimension_semantics<parallel>], iteration_bounds = array<i64: 2, 3>, scalar_prefetch = 0 : i64, scratch_operands = 1 : i64, tpu.core_type = #tpu.core_type<tc>, window_params = [{transform_indices = @transform_0, window_bounds = array<i64: 1, 8, 128>}, {transform_indices = @transform_1, window_bounds = array<i64: 1, 16, 128>}, {transform_indices = @transform_2, window_bounds = array<i64: 1, 8, 128>}, {pipeline_mode = #tpu.pipeline_mode<synchronous>, transform_indices = @transform_3, window_bounds = array<i64: 640, 256>}, {pipeline_mode = #tpu.pipeline_mode<synchronous>, transform_indices = @transform_4, window_bounds = array<i64: 1, 256>}, {pipeline_mode = #tpu.pipeline_mode<synchronous>, transform_indices = @transform_5, window_bounds = array<i64: 1, 256>}, {transform_indices = @transform_6, window_bounds = array<i64: 1, 16, 256>}]} {
    %0 = tpu.iota {dimensions = array<i32: 0>} : vector<8x1xi32>
    %c0 = arith.constant 0 : index
    %c0_0 = arith.constant 0 : index
    %c0_1 = arith.constant 0 : index
    %1 = vector.load %arg2[%c0, %c0_0, %c0_1] : memref<1x8x128xbf16, #tpu.memory_space<vmem>>, vector<1x8x128xbf16>
    %2 = vector.shape_cast %1 : vector<1x8x128xbf16> to vector<8x128xbf16>
    %c16_i32 = arith.constant 16 : i32
    %3 = arith.muli %arg1, %c16_i32 : i32
    %c8_i32 = arith.constant 8 : i32
    %4 = arith.subi %3, %c8_i32 : i32
    %5 = vector.broadcast %4 : i32 to vector<8x1xi32>
    %6 = arith.addi %0, %5 : vector<8x1xi32>
    %c0_i32 = arith.constant 0 : i32
    %7 = vector.broadcast %c0_i32 : i32 to vector<8x1xi32>
    %8 = arith.cmpi sge, %6, %7 : vector<8x1xi32>
    %cst = arith.constant 0.000000e+00 : bf16
    %9 = vector.broadcast %cst : bf16 to vector<8x128xbf16>
    %10 = vector.shape_cast %8 : vector<8x1xi1> to vector<8x1xi1>
    %11 = vector.broadcast %10 : vector<8x1xi1> to vector<8x128xi1>
    %12 = arith.select %11, %2, %9 : vector<8x128xi1>, vector<8x128xbf16>
    %c0_2 = arith.constant 0 : index
    %c0_3 = arith.constant 0 : index
    %c0_4 = arith.constant 0 : index
    %13 = vector.load %arg4[%c0_2, %c0_3, %c0_4] : memref<1x8x128xbf16, #tpu.memory_space<vmem>>, vector<1x8x128xbf16>
    %14 = vector.shape_cast %13 : vector<1x8x128xbf16> to vector<8x128xbf16>
    %c1_i32 = arith.constant 1 : i32
    %15 = arith.addi %arg1, %c1_i32 : i32
    %c16_i32_5 = arith.constant 16 : i32
    %16 = arith.muli %15, %c16_i32_5 : i32
    %17 = vector.broadcast %16 : i32 to vector<8x1xi32>
    %18 = arith.addi %0, %17 : vector<8x1xi32>
    %c40_i32 = arith.constant 40 : i32
    %19 = vector.broadcast %c40_i32 : i32 to vector<8x1xi32>
    %20 = arith.cmpi slt, %18, %19 : vector<8x1xi32>
    %cst_6 = arith.constant 0.000000e+00 : bf16
    %21 = vector.broadcast %cst_6 : bf16 to vector<8x128xbf16>
    %22 = vector.shape_cast %20 : vector<8x1xi1> to vector<8x1xi1>
    %23 = vector.broadcast %22 : vector<8x1xi1> to vector<8x128xi1>
    %24 = arith.select %23, %14, %21 : vector<8x128xi1>, vector<8x128xbf16>
    %c0_7 = arith.constant 0 : index
    %c0_8 = arith.constant 0 : index
    %25 = vector.load %arg9[%c0_7, %c0_8] : memref<32x128xbf16, #tpu.memory_space<vmem>>, vector<8x128xbf16>
    tpu.vector_store %arg9[%c0_7, %c0_8], %12 {strides = array<i32>} : memref<32x128xbf16, #tpu.memory_space<vmem>>, vector<8x128xbf16>,
    %c0_9 = arith.constant 0 : index
    %c0_10 = arith.constant 0 : index
    %c0_11 = arith.constant 0 : index
    %26 = vector.load %arg3[%c0_9, %c0_10, %c0_11] : memref<1x16x128xbf16, #tpu.memory_space<vmem>>, vector<1x16x128xbf16>
    %27 = vector.shape_cast %26 : vector<1x16x128xbf16> to vector<16x128xbf16>
    %c8 = arith.constant 8 : index
    %c0_12 = arith.constant 0 : index
    %28 = vector.load %arg9[%c8, %c0_12] : memref<32x128xbf16, #tpu.memory_space<vmem>>, vector<16x128xbf16>
    tpu.vector_store %arg9[%c8, %c0_12], %27 {strides = array<i32>} : memref<32x128xbf16, #tpu.memory_space<vmem>>, vector<16x128xbf16>,
    %c24 = arith.constant 24 : index
    %c0_13 = arith.constant 0 : index
    %29 = vector.load %arg9[%c24, %c0_13] : memref<32x128xbf16, #tpu.memory_space<vmem>>, vector<8x128xbf16>
    tpu.vector_store %arg9[%c24, %c0_13], %24 {strides = array<i32>} : memref<32x128xbf16, #tpu.memory_space<vmem>>, vector<8x128xbf16>,
    %c6 = arith.constant 6 : index
    %c0_14 = arith.constant 0 : index
    %30 = vector.load %arg9[%c6, %c0_14] : memref<32x128xbf16, #tpu.memory_space<vmem>>, vector<16x128xbf16>
    %c7 = arith.constant 7 : index
    %c0_15 = arith.constant 0 : index
    %31 = vector.load %arg9[%c7, %c0_15] : memref<32x128xbf16, #tpu.memory_space<vmem>>, vector<16x128xbf16>
    %c8_16 = arith.constant 8 : index
    %c0_17 = arith.constant 0 : index
    %32 = vector.load %arg9[%c8_16, %c0_17] : memref<32x128xbf16, #tpu.memory_space<vmem>>, vector<16x128xbf16>
    %c9 = arith.constant 9 : index
    %c0_18 = arith.constant 0 : index
    %33 = vector.load %arg9[%c9, %c0_18] : memref<32x128xbf16, #tpu.memory_space<vmem>>, vector<16x128xbf16>
    %c10 = arith.constant 10 : index
    %c0_19 = arith.constant 0 : index
    %34 = vector.load %arg9[%c10, %c0_19] : memref<32x128xbf16, #tpu.memory_space<vmem>>, vector<16x128xbf16>
    %35 = tpu.concatenate %30, %31, %32, %33, %34 in 1 : vector<16x128xbf16>, vector<16x128xbf16>, vector<16x128xbf16>, vector<16x128xbf16>, vector<16x128xbf16> -> vector<16x640xbf16>
    %c0_20 = arith.constant 0 : index
    %c0_21 = arith.constant 0 : index
    %36 = vector.load %arg5[%c0_20, %c0_21] : memref<640x256xbf16, #tpu.memory_space<vmem>>, vector<640x256xbf16>
    %cst_22 = arith.constant dense<0.000000e+00> : vector<16x256xf32>
    %37 = tpu.matmul %35, %36, %cst_22 {dimension_numbers = #tpu.dot_dimension_numbers<[1], [0], [0], [1], [0, 0, 1, 1], [], []>} : vector<16x640xbf16>, vector<640x256xbf16>, vector<16x256xf32> -> vector<16x256xf32>
    %c0_23 = arith.constant 0 : index
    %c0_24 = arith.constant 0 : index
    %38 = vector.load %arg6[%c0_23, %c0_24] : memref<1x256xf32, #tpu.memory_space<vmem>>, vector<1x256xf32>
    %39 = vector.broadcast %38 : vector<1x256xf32> to vector<16x256xf32>
    %40 = arith.mulf %37, %39 : vector<16x256xf32>
    %c0_25 = arith.constant 0 : index
    %c0_26 = arith.constant 0 : index
    %41 = vector.load %arg7[%c0_25, %c0_26] : memref<1x256xf32, #tpu.memory_space<vmem>>, vector<1x256xf32>
    %42 = vector.broadcast %41 : vector<1x256xf32> to vector<16x256xf32>
    %43 = arith.addf %40, %42 : vector<16x256xf32>
    %44 = math.tanh %43 : vector<16x256xf32>
    %c1_i32_27 = arith.constant 1 : i32
    %45 = arith.addi %arg1, %c1_i32_27 : i32
    %c16_i32_28 = arith.constant 16 : i32
    %46 = arith.muli %45, %c16_i32_28 : i32
    %c40_i32_29 = arith.constant 40 : i32
    %47 = arith.cmpi sle, %46, %c40_i32_29 : i32
    %48 = arith.extui %47 : i1 to i32
    %c0_i32_30 = arith.constant 0 : i32
    %49 = arith.cmpi ne, %48, %c0_i32_30 : i32
    scf.if %49 {
      %55 = arith.truncf %44 : vector<16x256xf32> to vector<16x256xbf16>
      %c0_35 = arith.constant 0 : index
      %c0_36 = arith.constant 0 : index
      %c0_37 = arith.constant 0 : index
      %56 = vector.load %arg8[%c0_35, %c0_36, %c0_37] : memref<1x16x256xbf16, #tpu.memory_space<vmem>>, vector<1x16x256xbf16>
      %57 = vector.shape_cast %56 : vector<1x16x256xbf16> to vector<16x256xbf16>
      %58 = vector.shape_cast %55 : vector<16x256xbf16> to vector<1x16x256xbf16>
      tpu.vector_store %arg8[%c0_35, %c0_36, %c0_37], %58 {strides = array<i32>} : memref<1x16x256xbf16, #tpu.memory_space<vmem>>, vector<1x16x256xbf16>,
    } else {
    }
    %c1_i32_31 = arith.constant 1 : i32
    %50 = arith.addi %arg1, %c1_i32_31 : i32
    %c16_i32_32 = arith.constant 16 : i32
    %51 = arith.muli %50, %c16_i32_32 : i32
    %c40_i32_33 = arith.constant 40 : i32
    %52 = arith.cmpi sgt, %51, %c40_i32_33 : i32
    %53 = arith.extui %52 : i1 to i32
    %c0_i32_34 = arith.constant 0 : i32
    %54 = arith.cmpi ne, %53, %c0_i32_34 : i32
    scf.if %54 {
      %55 = tpu.iota {dimensions = array<i32: 0>} : vector<16x1xi32>
      %c16_i32_35 = arith.constant 16 : i32
      %56 = arith.muli %arg1, %c16_i32_35 : i32
      %57 = vector.broadcast %56 : i32 to vector<16x1xi32>
      %58 = arith.addi %55, %57 : vector<16x1xi32>
      %c40_i32_36 = arith.constant 40 : i32
      %59 = vector.broadcast %c40_i32_36 : i32 to vector<16x1xi32>
      %60 = arith.cmpi slt, %58, %59 : vector<16x1xi32>
      %cst_37 = arith.constant 0.000000e+00 : f32
      %61 = vector.shape_cast %60 : vector<16x1xi1> to vector<16x1xi1>
      %62 = vector.broadcast %61 : vector<16x1xi1> to vector<16x256xi1>
      %63 = vector.broadcast %cst_37 : f32 to vector<16x256xf32>
      %64 = arith.select %62, %44, %63 : vector<16x256xi1>, vector<16x256xf32>
      %65 = arith.truncf %64 : vector<16x256xf32> to vector<16x256xbf16>
      %c0_38 = arith.constant 0 : index
      %c0_39 = arith.constant 0 : index
      %c0_40 = arith.constant 0 : index
      %66 = vector.load %arg8[%c0_38, %c0_39, %c0_40] : memref<1x16x256xbf16, #tpu.memory_space<vmem>>, vector<1x16x256xbf16>
      %67 = vector.shape_cast %66 : vector<1x16x256xbf16> to vector<16x256xbf16>
      %68 = vector.shape_cast %65 : vector<16x256xbf16> to vector<1x16x256xbf16>
      tpu.vector_store %arg8[%c0_38, %c0_39, %c0_40], %68 {strides = array<i32>} : memref<1x16x256xbf16, #tpu.memory_space<vmem>>, vector<1x16x256xbf16>,
    } else {
    }
    return
  }
  func.func @transform_0(%arg0: i32, %arg1: i32) -> (i32, i32, i32) {
    %c2_i32 = arith.constant 2 : i32
    %0 = arith.muli %arg1, %c2_i32 : i32
    %c1_i32 = arith.constant 1 : i32
    %1 = arith.subi %0, %c1_i32 : i32
    %c0_i32 = arith.constant 0 : i32
    %2 = arith.maxsi %1, %c0_i32 : i32
    %c0_i32_0 = arith.constant 0 : i32
    %c0_i32_1 = arith.constant 0 : i32
    return %arg0, %2, %c0_i32_0 : i32, i32, i32
  }
  func.func @transform_1(%arg0: i32, %arg1: i32) -> (i32, i32, i32) {
    %c0_i32 = arith.constant 0 : i32
    %c0_i32_0 = arith.constant 0 : i32
    return %arg0, %arg1, %c0_i32 : i32, i32, i32
  }
  func.func @transform_2(%arg0: i32, %arg1: i32) -> (i32, i32, i32) {
    %c1_i32 = arith.constant 1 : i32
    %0 = arith.addi %arg1, %c1_i32 : i32
    %c2_i32 = arith.constant 2 : i32
    %1 = arith.muli %0, %c2_i32 : i32
    %c5_i32 = arith.constant 5 : i32
    %2 = arith.minsi %1, %c5_i32 : i32
    %c0_i32 = arith.constant 0 : i32
    %c0_i32_0 = arith.constant 0 : i32
    return %arg0, %2, %c0_i32 : i32, i32, i32
  }
  func.func @transform_3(%arg0: i32, %arg1: i32) -> (i32, i32) {
    %c0_i32 = arith.constant 0 : i32
    %c0_i32_0 = arith.constant 0 : i32
    %c0_i32_1 = arith.constant 0 : i32
    return %c0_i32, %c0_i32_0 : i32, i32
  }
  func.func @transform_4(%arg0: i32, %arg1: i32) -> (i32, i32) {
    %c0_i32 = arith.constant 0 : i32
    %c0_i32_0 = arith.constant 0 : i32
    %c0_i32_1 = arith.constant 0 : i32
    return %c0_i32, %c0_i32_0 : i32, i32
  }
  func.func @transform_5(%arg0: i32, %arg1: i32) -> (i32, i32) {
    %c0_i32 = arith.constant 0 : i32
    %c0_i32_0 = arith.constant 0 : i32
    %c0_i32_1 = arith.constant 0 : i32
    return %c0_i32, %c0_i32_0 : i32, i32
  }
  func.func @transform_6(%arg0: i32, %arg1: i32) -> (i32, i32, i32) {
    %c0_i32 = arith.constant 0 : i32
    %c0_i32_0 = arith.constant 0 : i32
    return %arg0, %arg1, %c0_i32 : i32, i32, i32
  }
}

</mosaic_0001>

<llo_original>
// kernel: tpu_custom_call.1
$region0: #{tpu_custom_call.1}
  #allocation0 [shape = 'u32[]', space=smem, size = 0x4, offset = 0x4, fixed_abs, tag = 'smem constant byte address 0x4 - core index']
  #allocation1 [shape = 'u32[144,128]{1,0:T(1,128)}', space=vmem, size = 0x12000, scoped, tag = 'internal scratch']
  #allocation2 [shape = 'bf16[32,128]{1,0:T(16,128)(2,1)}', space=vmem, size = 0x2000, scoped, tag = 'scratch operand']
  %s0 = inlined_call_operand.hbm [shape: bf16[2,48,128], index: 0, kind: input, shape index: {}]
  %s1 = inlined_call_operand.hbm [shape: bf16[2,48,128], index: 1, kind: input, shape index: {}]
  %s2 = inlined_call_operand.hbm [shape: bf16[2,48,128], index: 2, kind: input, shape index: {}]
  %s3 = inlined_call_operand.hbm [shape: bf16[640,256], index: 3, kind: input, shape index: {}]
  %s4 = inlined_call_operand.vmem [shape: f32[1,256], index: 4, kind: input, shape index: {}]
  %s5 = inlined_call_operand.vmem [shape: f32[1,256], index: 5, kind: input, shape index: {}]
  %s6 = inlined_call_operand.hbm [shape: bf16[2,48,256], index: 6, kind: output, shape index: {}]
  %s7 = sld [smem:[#allocation0]]
  $region81: #{tpu_custom_call.1} parent=0
    _
  %s9 = ssub.s32 1, %s7
  %s10 = scalar_select 0, %s9, %s7
  $region1: #{tpu_custom_call.1} parent=0
    #allocation3 [shape = 'u8[4096]{0}', space=vmem, size = 0x1000, scoped, tag = 'input window, operand 0']
    #allocation4 [shape = 's32[2]{0}', space=sflag, size = 0x8, scoped, tag = 'scoped memory for tpu_custom_call.1']
    #allocation5 [shape = 's32[2]{0}', space=sflag, size = 0x8, scoped, tag = 'scoped memory for tpu_custom_call.1']
    #allocation6 [shape = 'u8[8192]{0}', space=vmem, size = 0x2000, scoped, tag = 'input window, operand 1']
    #allocation7 [shape = 's32[2]{0}', space=sflag, size = 0x8, scoped, tag = 'scoped memory for tpu_custom_call.1']
    #allocation8 [shape = 'u8[4096]{0}', space=vmem, size = 0x1000, scoped, tag = 'input window, operand 2']
    #allocation9 [shape = 'u8[327680]{0}', space=vmem, size = 0x50000, scoped, tag = 'input window, operand 3, single buffered']
    #allocation10 [shape = 's32[1]{0}', space=sflag, size = 0x4, scoped, tag = 'scoped memory for tpu_custom_call.1']
    #allocation11 [shape = 'u8[16384]{0}', space=vmem, size = 0x4000, scoped, tag = 'output window, operand 0']
    %11 = vsyncpa [#allocation4], 0
    %s12 = scalar_lea.sflag [#allocation4], 1
    %13 = vsyncpa %s12, 0
    %14 = vsyncpa [#allocation7], 0
    %s15 = scalar_lea.sflag [#allocation7], 1
    %16 = vsyncpa %s15, 0
    %17 = vsyncpa [#allocation10], 0
    %18 = vsyncpa [#allocation5], 0
    %s19 = scalar_lea.sflag [#allocation5], 1
    %20 = vsyncpa %s19, 0
    loop: start=0, step=1, limit=8
    $region2: #{tpu_custom_call.1} parent=1 // loop_pre_header
      _
    $region3: #{tpu_custom_call.1} parent=1 // loop_header
      %s22 = sphi 0, %s26
      %p23 = scmp.ge.s32.totalorder %s22, 8
      %s29 = sphi 0, %s41
      %s30 = sphi 0, %s37
      %s31 = sphi 0, %s29
      %s32 = sphi 0, %s30
      %s33 = sphi 0, %s31
      %s34 = sphi 0, %s32
      %s54 = sphi 0, %s56
      %s57 = sphi 0, %s54
      %s58 = sphi 0, %s57
      %s74 = sphi 0, %s58
      %s82 = sphi 0, %s84
      %s85 = sphi 0, %s82
      %s86 = sphi 0, %s85
      %s102 = sphi 0, %s86
      %s118 = sphi 0, %s120
      %s121 = sphi 0, %s118
      %s122 = sphi 0, %s121
      %s138 = sphi 0, %s122
      %s142 = sphi 0, %s142
      %s144 = sphi 0, %s142
      %s145 = sphi 0, %s144
      %s159 = sphi 0, %s145
      %s163 = sphi 0, %s163
      %s165 = sphi 0, %s163
      %s166 = sphi 0, %s165
      %s180 = sphi 0, %s166
      %s184 = sphi 0, %s184
      %s186 = sphi 0, %s184
      %s187 = sphi 0, %s186
      %s201 = sphi 0, %s187
      %s209 = sphi 0, %s211
      %s212 = sphi 0, %s209
      %s213 = sphi 0, %s212
      %s229 = sphi 0, %s213
    $region4: #{tpu_custom_call.1} parent=1 // loop_header_branch
      %25 = sbr.rel (%p23) target = $region8
    $region5: #{tpu_custom_call.1} parent=1 // loop_body
      %s27 = ssub.s32 %s22, 1
      %s28 = ssub.s32 %s22, 2
      %s35 = sadd.s32 1, %s30
      %p36 = scmp.ge.s32.totalorder %s35, 3
      %s37 = scalar_select %p36, 0, %s35
      %s38 = sadd.s32 1, %s29
      %s39 = scalar_select %p36, %s38, %s29
      %p40 = scmp.ge.s32.totalorder %s39, 2
      %s41 = scalar_select %p40, 0, %s39
      %s42 = smul.u32 %s30, 2
      %s43 = ssub.s32 %s42, 1
      %p44 = scmp.gt.s32.totalorder %s43, 0
      %s45 = scalar_select %p44, %s43, 0
      %s46 = smul.u32 %s37, 2
      %s47 = ssub.s32 %s46, 1
      %p48 = scmp.gt.s32.totalorder %s47, 0
      %s49 = scalar_select %p48, %s47, 0
      %s50 = ssub.s32 %s29, %s41
      %s51 = ssub.s32 %s45, %s49
      %s52 = sor.u32 %s50, %s51
      %p53 = scmp.eq.s32.totalorder %s52, 0
      %s55 = sadd.s32 %s54, 1
      %s56 = scalar_select %p53, %s54, %s55
      %p59 = pneg %p53
      %p60 = scmp.eq.s32.totalorder %s22, 5
      %p61 = por %p59, %p60
      %p62 = scmp.ne.s32.totalorder %s54, %s57
      %p63 = scmp.eq.s32.totalorder %s22, 0
      %p64 = por %p62, %p63
      %p65 = scmp.ne.s32.totalorder %s54, %s57
      %p66 = scmp.eq.s32.totalorder %s27, 5
      %p67 = por %p65, %p66
      %p68 = scmp.ne.s32.totalorder %s57, %s58
      %p69 = scmp.eq.s32.totalorder %s27, 0
      %p70 = por %p68, %p69
      %p71 = scmp.ne.s32.totalorder %s57, %s58
      %p72 = scmp.eq.s32.totalorder %s28, 5
      %p73 = por %p71, %p72
      %p75 = scmp.ne.s32.totalorder %s58, %s74
      %p76 = scmp.eq.s32.totalorder %s28, 0
      %p77 = por %p75, %p76
      %s78 = ssub.s32 %s29, %s41
      %s79 = ssub.s32 %s30, %s37
      %s80 = sor.u32 %s78, %s79
      %p81 = scmp.eq.s32.totalorder %s80, 0
      %s83 = sadd.s32 %s82, 1
      %s84 = scalar_select %p81, %s82, %s83
      %p87 = pneg %p81
      %p88 = scmp.eq.s32.totalorder %s22, 5
      %p89 = por %p87, %p88
      %p90 = scmp.ne.s32.totalorder %s82, %s85
      %p91 = scmp.eq.s32.totalorder %s22, 0
      %p92 = por %p90, %p91
      %p93 = scmp.ne.s32.totalorder %s82, %s85
      %p94 = scmp.eq.s32.totalorder %s27, 5
      %p95 = por %p93, %p94
      %p96 = scmp.ne.s32.totalorder %s85, %s86
      %p97 = scmp.eq.s32.totalorder %s27, 0
      %p98 = por %p96, %p97
      %p99 = scmp.ne.s32.totalorder %s85, %s86
      %p100 = scmp.eq.s32.totalorder %s28, 5
      %p101 = por %p99, %p100
      %p103 = scmp.ne.s32.totalorder %s86, %s102
      %p104 = scmp.eq.s32.totalorder %s28, 0
      %p105 = por %p103, %p104
      %s106 = sadd.s32 %s30, 1
      %s107 = smul.u32 %s106, 2
      %p108 = scmp.lt.s32.totalorder %s107, 5
      %s109 = scalar_select %p108, %s107, 5
      %s110 = sadd.s32 %s37, 1
      %s111 = smul.u32 %s110, 2
      %p112 = scmp.lt.s32.totalorder %s111, 5
      %s113 = scalar_select %p112, %s111, 5
      %s114 = ssub.s32 %s29, %s41
      %s115 = ssub.s32 %s109, %s113
      %s116 = sor.u32 %s114, %s115
      %p117 = scmp.eq.s32.totalorder %s116, 0
      %s119 = sadd.s32 %s118, 1
      %s120 = scalar_select %p117, %s118, %s119
      %p123 = pneg %p117
      %p124 = scmp.eq.s32.totalorder %s22, 5
      %p125 = por %p123, %p124
      %p126 = scmp.ne.s32.totalorder %s118, %s121
      %p127 = scmp.eq.s32.totalorder %s22, 0
      %p128 = por %p126, %p127
      %p129 = scmp.ne.s32.totalorder %s118, %s121
      %p130 = scmp.eq.s32.totalorder %s27, 5
      %p131 = por %p129, %p130
      %p132 = scmp.ne.s32.totalorder %s121, %s122
      %p133 = scmp.eq.s32.totalorder %s27, 0
      %p134 = por %p132, %p133
      %p135 = scmp.ne.s32.totalorder %s121, %s122
      %p136 = scmp.eq.s32.totalorder %s28, 5
      %p137 = por %p135, %p136
      %p139 = scmp.ne.s32.totalorder %s122, %s138
      %p140 = scmp.eq.s32.totalorder %s28, 0
      %p141 = por %p139, %p140
      %s143 = sadd.s32 %s142, 1
      %p146 = scmp.eq.s32.totalorder %s22, 5
      %p147 = scmp.ne.s32.totalorder %s142, %s144
      %p148 = scmp.eq.s32.totalorder %s22, 0
      %p149 = por %p147, %p148
      %p150 = scmp.ne.s32.totalorder %s142, %s144
      %p151 = scmp.eq.s32.totalorder %s27, 5
      %p152 = por %p150, %p151
      %p153 = scmp.ne.s32.totalorder %s144, %s145
      %p154 = scmp.eq.s32.totalorder %s27, 0
      %p155 = por %p153, %p154
      %p156 = scmp.ne.s32.totalorder %s144, %s145
      %p157 = scmp.eq.s32.totalorder %s28, 5
      %p158 = por %p156, %p157
      %p160 = scmp.ne.s32.totalorder %s145, %s159
      %p161 = scmp.eq.s32.totalorder %s28, 0
      %p162 = por %p160, %p161
      %s164 = sadd.s32 %s163, 1
      %p167 = scmp.eq.s32.totalorder %s22, 5
      %p168 = scmp.ne.s32.totalorder %s163, %s165
      %p169 = scmp.eq.s32.totalorder %s22, 0
      %p170 = por %p168, %p169
      %p171 = scmp.ne.s32.totalorder %s163, %s165
      %p172 = scmp.eq.s32.totalorder %s27, 5
      %p173 = por %p171, %p172
      %p174 = scmp.ne.s32.totalorder %s165, %s166
      %p175 = scmp.eq.s32.totalorder %s27, 0
      %p176 = por %p174, %p175
      %p177 = scmp.ne.s32.totalorder %s165, %s166
      %p178 = scmp.eq.s32.totalorder %s28, 5
      %p179 = por %p177, %p178
      %p181 = scmp.ne.s32.totalorder %s166, %s180
      %p182 = scmp.eq.s32.totalorder %s28, 0
      %p183 = por %p181, %p182
      %s185 = sadd.s32 %s184, 1
      %p188 = scmp.eq.s32.totalorder %s22, 5
      %p189 = scmp.ne.s32.totalorder %s184, %s186
      %p190 = scmp.eq.s32.totalorder %s22, 0
      %p191 = por %p189, %p190
      %p192 = scmp.ne.s32.totalorder %s184, %s186
      %p193 = scmp.eq.s32.totalorder %s27, 5
      %p194 = por %p192, %p193
      %p195 = scmp.ne.s32.totalorder %s186, %s187
      %p196 = scmp.eq.s32.totalorder %s27, 0
      %p197 = por %p195, %p196
      %p198 = scmp.ne.s32.totalorder %s186, %s187
      %p199 = scmp.eq.s32.totalorder %s28, 5
      %p200 = por %p198, %p199
      %p202 = scmp.ne.s32.totalorder %s187, %s201
      %p203 = scmp.eq.s32.totalorder %s28, 0
      %p204 = por %p202, %p203
      %s205 = ssub.s32 %s29, %s41
      %s206 = ssub.s32 %s30, %s37
      %s207 = sor.u32 %s205, %s206
      %p208 = scmp.eq.s32.totalorder %s207, 0
      %s210 = sadd.s32 %s209, 1
      %s211 = scalar_select %p208, %s209, %s210
      %p214 = pneg %p208
      %p215 = scmp.eq.s32.totalorder %s22, 5
      %p216 = por %p214, %p215
      %p217 = scmp.ne.s32.totalorder %s209, %s212
      %p218 = scmp.eq.s32.totalorder %s22, 0
      %p219 = por %p217, %p218
      %p220 = scmp.ne.s32.totalorder %s209, %s212
      %p221 = scmp.eq.s32.totalorder %s27, 5
      %p222 = por %p220, %p221
      %p223 = scmp.ne.s32.totalorder %s212, %s213
      %p224 = scmp.eq.s32.totalorder %s27, 0
      %p225 = por %p223, %p224
      %p226 = scmp.ne.s32.totalorder %s212, %s213
      %p227 = scmp.eq.s32.totalorder %s28, 5
      %p228 = por %p226, %p227
      %p230 = scmp.ne.s32.totalorder %s213, %s229
      %p231 = scmp.eq.s32.totalorder %s28, 0
      %p232 = por %p230, %p231
      %p233 = scmp.le.s32.totalorder 1, %s22
      %p234 = scmp.lt.s32.totalorder %s22, 7
      %p235 = pnand %p233, %p234
      %p236 = pneg %p235
      // Predicated region
      $region9: #{tpu_custom_call.1} parent=5 // pred_check
        _
      $region10: #{tpu_custom_call.1} parent=5 // pred_check_branch
        %238 = sbr.rel (%p235) target = $region12
      $region11: #{tpu_custom_call.1} parent=5 // pred_region
        %s239 = ssub.s32 %s22, 1
        // Predicated region
        $region13: #{tpu_custom_call.1} parent=11 // pred_check
          %p240 = pneg %p155
        $region14: #{tpu_custom_call.1} parent=11 // pred_check_branch
          %242 = sbr.rel (%p240) target = $region16
        $region15: #{tpu_custom_call.1} parent=11 // pred_region
          %s244 = ssub.s32 10240, 10240
          %245 = vsyncadd [#allocation10], %s244
          %s246 = sshll.u32 [#allocation9], 4
          %s247 = int_to_ptr.vmem [resolvable:$true] %s246
          %252 = dma.hbm_to_vmem [thread:$0]  %s3, 10240, %s247, [#allocation10], 128, 128, 8
        $region16: #{tpu_custom_call.1} parent=11 // pred_fallthru
          _
        // Predicated region
        $region17: #{tpu_custom_call.1} parent=11 // pred_check
          %p253 = pneg %p176
        $region18: #{tpu_custom_call.1} parent=11 // pred_check_branch
          %255 = sbr.rel (%p253) target = $region20
        $region19: #{tpu_custom_call.1} parent=11 // pred_region
          _
        $region20: #{tpu_custom_call.1} parent=11 // pred_fallthru
          _
        // Predicated region
        $region21: #{tpu_custom_call.1} parent=11 // pred_check
          %p256 = pneg %p197
        $region22: #{tpu_custom_call.1} parent=11 // pred_check_branch
          %258 = sbr.rel (%p256) target = $region24
        $region23: #{tpu_custom_call.1} parent=11 // pred_region
          _
        $region24: #{tpu_custom_call.1} parent=11 // pred_fallthru
          _
      $region12: #{tpu_custom_call.1} parent=5 // pred_fallthru
        _
      %p259 = scmp.lt.s32.totalorder %s22, 6
      // Predicated region
      $region25: #{tpu_custom_call.1} parent=5 // pred_check
        %p260 = pneg %p259
      $region26: #{tpu_custom_call.1} parent=5 // pred_check_branch
        %262 = sbr.rel (%p260) target = $region28
      $region27: #{tpu_custom_call.1} parent=5 // pred_region
        // Predicated region
        $region29: #{tpu_custom_call.1} parent=27 // pred_check
          %p263 = pneg %p64
        $region30: #{tpu_custom_call.1} parent=27 // pred_check_branch
          %265 = sbr.rel (%p263) target = $region32
        $region31: #{tpu_custom_call.1} parent=27 // pred_region
          %s266 = sand.u32 %s54, 1
          %s267 = scalar_lea.sflag [#allocation4], %s266
          %s268 = sand.u32 %s54, 1
          %s269 = smul.addr %s268, 4
          %s270 = scalar_lea.vmem [#allocation3], %s269
          %s271 = smul.u32 %s30, 2
          %s272 = ssub.s32 %s271, 1
          %p273 = scmp.gt.s32.totalorder %s272, 0
          %s274 = scalar_select %p273, %s272, 0
          %s276 = ssub.s32 64, 64
          %277 = vsyncadd %s267, %s276
          %s278 = smul.addr %s29, 6
          %s279 = sadd.s32 %s274, %s278
          %s280 = smul.addr %s279, 64
          %s281 = scalar_lea.hbm %s0, %s280
          %s283 = sshll.u32 %s270, 4
          %s284 = int_to_ptr.vmem [resolvable:$true] %s283
          %286 = dma.hbm_to_vmem [thread:$0]  %s281, 64, %s284, %s267
        $region32: #{tpu_custom_call.1} parent=27 // pred_fallthru
          _
        // Predicated region
        $region33: #{tpu_custom_call.1} parent=27 // pred_check
          %p287 = pneg %p92
        $region34: #{tpu_custom_call.1} parent=27 // pred_check_branch
          %289 = sbr.rel (%p287) target = $region36
        $region35: #{tpu_custom_call.1} parent=27 // pred_region
          %s290 = sand.u32 %s22, 1
          %s291 = scalar_lea.sflag [#allocation7], %s290
          %s292 = sand.u32 %s82, 1
          %s293 = smul.addr %s292, 8
          %s294 = scalar_lea.vmem [#allocation6], %s293
          %s295 = smul.u32 2, %s30
          %s297 = ssub.s32 128, 128
          %298 = vsyncadd %s291, %s297
          %s299 = smul.addr %s29, 6
          %s300 = sadd.s32 %s295, %s299
          %s301 = smul.addr %s300, 64
          %s302 = scalar_lea.hbm %s1, %s301
          %s303 = sshll.u32 %s294, 4
          %s304 = int_to_ptr.vmem [resolvable:$true] %s303
          %309 = dma.hbm_to_vmem [thread:$0]  %s302, 128, %s304, %s291, 64, 64, 4
        $region36: #{tpu_custom_call.1} parent=27 // pred_fallthru
          _
        // Predicated region
        $region37: #{tpu_custom_call.1} parent=27 // pred_check
          %p310 = pneg %p128
        $region38: #{tpu_custom_call.1} parent=27 // pred_check_branch
          %312 = sbr.rel (%p310) target = $region40
        $region39: #{tpu_custom_call.1} parent=27 // pred_region
          %s313 = sand.u32 %s22, 1
          %s314 = scalar_lea.sflag [#allocation7], %s313
          %s315 = sand.u32 %s118, 1
          %s316 = smul.addr %s315, 4
          %s317 = scalar_lea.vmem [#allocation8], %s316
          %s318 = sadd.s32 %s30, 1
          %s319 = smul.u32 %s318, 2
          %p320 = scmp.lt.s32.totalorder %s319, 5
          %s321 = scalar_select %p320, %s319, 5
          %s323 = ssub.s32 64, 64
          %324 = vsyncadd %s314, %s323
          %s325 = smul.addr %s29, 6
          %s326 = sadd.s32 %s321, %s325
          %s327 = smul.addr %s326, 64
          %s328 = scalar_lea.hbm %s2, %s327
          %s330 = sshll.u32 %s317, 4
          %s331 = int_to_ptr.vmem [resolvable:$true] %s330
          %333 = dma.hbm_to_vmem [thread:$0]  %s328, 64, %s331, %s314
        $region40: #{tpu_custom_call.1} parent=27 // pred_fallthru
          _
      $region28: #{tpu_custom_call.1} parent=5 // pred_fallthru
        _
      %p334 = scmp.le.s32.totalorder 1, %s22
      %p335 = scmp.lt.s32.totalorder %s22, 7
      %p336 = pnand %p334, %p335
      %p337 = pneg %p336
      // Predicated region
      $region41: #{tpu_custom_call.1} parent=5 // pred_check
        _
      $region42: #{tpu_custom_call.1} parent=5 // pred_check_branch
        %339 = sbr.rel (%p336) target = $region44
      $region43: #{tpu_custom_call.1} parent=5 // pred_region
        %s340 = ssub.s32 %s22, 1
        %s341 = sand.u32 %s57, 1
        %s342 = scalar_lea.sflag [#allocation4], %s341
        %s343 = sand.u32 %s57, 1
        %s344 = smul.addr %s343, 4
        %s345 = scalar_lea.vmem [#allocation3], %s344
        // Predicated region
        $region45: #{tpu_custom_call.1} parent=43 // pred_check
          %p346 = pneg %p70
        $region46: #{tpu_custom_call.1} parent=43 // pred_check_branch
          %348 = sbr.rel (%p346) target = $region48
        $region47: #{tpu_custom_call.1} parent=43 // pred_region
          %349 = dma.done %s342, 64
        $region48: #{tpu_custom_call.1} parent=43 // pred_fallthru
          _
        %s350 = sand.u32 %s27, 1
        %s351 = scalar_lea.sflag [#allocation7], %s350
        %s352 = sand.u32 %s85, 1
        %s353 = smul.addr %s352, 8
        %s354 = scalar_lea.vmem [#allocation6], %s353
        // Predicated region
        $region49: #{tpu_custom_call.1} parent=43 // pred_check
          %p355 = pneg %p98
        $region50: #{tpu_custom_call.1} parent=43 // pred_check_branch
          %357 = sbr.rel (%p355) target = $region52
        $region51: #{tpu_custom_call.1} parent=43 // pred_region
          %358 = dma.done %s351, 128
        $region52: #{tpu_custom_call.1} parent=43 // pred_fallthru
          _
        %s359 = sand.u32 %s27, 1
        %s360 = scalar_lea.sflag [#allocation7], %s359
        %s361 = sand.u32 %s121, 1
        %s362 = smul.addr %s361, 4
        %s363 = scalar_lea.vmem [#allocation8], %s362
        // Predicated region
        $region53: #{tpu_custom_call.1} parent=43 // pred_check
          %p364 = pneg %p134
        $region54: #{tpu_custom_call.1} parent=43 // pred_check_branch
          %366 = sbr.rel (%p364) target = $region56
        $region55: #{tpu_custom_call.1} parent=43 // pred_region
          %367 = dma.done %s360, 64
        $region56: #{tpu_custom_call.1} parent=43 // pred_fallthru
          _
        // Predicated region
        $region57: #{tpu_custom_call.1} parent=43 // pred_check
          %p368 = pneg %p155
        $region58: #{tpu_custom_call.1} parent=43 // pred_check_branch
          %370 = sbr.rel (%p368) target = $region60
        $region59: #{tpu_custom_call.1} parent=43 // pred_region
          %371 = dma.done [#allocation10], 10240
        $region60: #{tpu_custom_call.1} parent=43 // pred_fallthru
          _
        %s372 = sand.u32 %s57, 1
        %s373 = scalar_lea.sflag [#allocation4], %s372
        %s374 = sand.u32 %s57, 1
        %s375 = smul.addr %s374, 4
        %s376 = scalar_lea.vmem [#allocation3], %s375
        %p377 = pneg %p70
        %p378 = pneg %p67
        %s379 = sand.u32 %s27, 1
        %s380 = scalar_lea.sflag [#allocation7], %s379
        %s381 = sand.u32 %s85, 1
        %s382 = smul.addr %s381, 8
        %s383 = scalar_lea.vmem [#allocation6], %s382
        %p384 = pneg %p98
        %p385 = pneg %p95
        %s386 = sand.u32 %s27, 1
        %s387 = scalar_lea.sflag [#allocation7], %s386
        %s388 = sand.u32 %s121, 1
        %s389 = smul.addr %s388, 4
        %s390 = scalar_lea.vmem [#allocation8], %s389
        %p391 = pneg %p134
        %p392 = pneg %p131
        %p393 = pneg %p155
        %p394 = pneg %p152
        %p395 = pneg %p176
        %p396 = pneg %p173
        %p397 = pneg %p197
        %p398 = pneg %p194
        %p399 = pneg %p225
        %p400 = pneg %p222
        %s401 = sand.u32 %s212, 1
        %s402 = scalar_lea.sflag [#allocation5], %s401
        %s403 = sand.u32 %s212, 1
        %s404 = smul.addr %s403, 16
        %s405 = scalar_lea.vmem [#allocation11], %s404
        %s406 = smul.u32 %s32, 2
        %s407 = ssub.s32 %s406, 1
        %p408 = scmp.gt.s32.totalorder %s407, 0
        %s409 = scalar_select %p408, %s407, 0
        %s410 = smul.u32 2, %s32
        %s411 = sadd.s32 %s32, 1
        %s412 = smul.u32 %s411, 2
        %p413 = scmp.lt.s32.totalorder %s412, 5
        %s414 = scalar_select %p413, %s412, 5
        %s415 = smul.u32 2, %s32
        %v417 = vlaneseq
        %v418 = vshrl.u32 %v417, 7
        %v419 = vld [vmem:[%s345] sm:$0xf]
        %s420 = smul.u32 %s32, 16
        %s421 = ssub.s32 %s420, 8
        %v422 = vstv %s421
        %v423 = vadd.s32 %v418, %v422
        %vm424 = vcmp.ge.s32.totalorder %v423, 0
        %v425 = vsel %vm424, 1, 0
        %vm426 = vcmp.eq.s32.totalorder %v425, 1
        %vm427 = vmpackc.low %vm426, %vm426
        %v428 = vsel %vm427, %v419, 0
        %v429 = vld [vmem:[%s363] sm:$0xf]
        %s430 = sadd.s32 %s32, 1
        %s431 = smul.u32 %s430, 16
        %v432 = vstv %s431
        %v433 = vadd.s32 %v418, %v432
        %vm434 = vcmp.lt.s32.totalorder %v433, 40
        %v435 = vsel %vm434, 1, 0
        %vm436 = vcmp.eq.s32.totalorder %v435, 1
        %vm437 = vmpackc.low %vm436, %vm436
        %v438 = vsel %vm437, %v429, 0
        %439 = vst [vmem:[#allocation2] sm:$0xf] %v428
        %v440 = vld [vmem:[%s354] sm:$0xf]
        %v441 = vld [vmem:[%s354 + $0x4] sm:$0xf]
        %v444 = vunpack.c.l.b16 %v440
        %v445 = vunpack.c.l.b16 %v441
        %v446 = vpack.c.b16 %v444, %v444
        %v447 = vpack.c.b16 %v445, %v445
        %450 = vst [vmem:[#allocation2] sm:$0xf0] %v446
        %451 = vst [vmem:[#allocation2 + $0x8] sm:$0xf] %v447
        %v453 = vunpack.c.l.b16 %v438
        %v454 = vpack.c.b16 %v453, %v453
        %456 = vst [vmem:[#allocation2 + $0x8] sm:$0xf0] %v454
        %v457 = vld [vmem:[#allocation2] sm:$0xf8]
        %v458 = vld [vmem:[#allocation2 + $0x8] sm:$0x7]
        %v459 = vld [vmem:[#allocation2 + $0x8] sm:$0xf]
        %v460 = vld [vmem:[#allocation2] sm:$0xf0]
        %v461 = vld [vmem:[#allocation2 + $0x8] sm:$0x1f]
        %v462 = vld [vmem:[#allocation2] sm:$0xe0]
        %vm463 = vsmask.f32 7424
        %v465 = vshrl.u32 %v457, 16
        %v467 = vshll.u32 %v457, 16
        %v469 = vrot.slane %v467, 1
        %v470 = vor.u32 %v465, %v469
        %v472 = vshll.u32 %v459, 16
        %v474 = vrot.slane %v472, 1
        %v475 = vsel %vm463, %v470, %v474
        %v476 = vshrl.u32 %v459, 16
        %v478 = vor.u32 %v476, %v474
        %vm481 = vcmask 1046528
        %v482 = vrot.slane %v460, 1
        %v483 = vrot.slane %v459, 1
        %v484 = vsel %vm481, %v482, %v483
        %vm485 = vsmask.f32 6400
        %v487 = vshrl.u32 %v460, 16
        %v489 = vrot.slane %v487, 1
        %v490 = vshll.u32 %v460, 16
        %v492 = vrot.slane %v490, 2
        %v493 = vor.u32 %v489, %v492
        %v495 = vshrl.u32 %v461, 16
        %v497 = vrot.slane %v495, 1
        %v498 = vshll.u32 %v461, 16
        %v500 = vrot.slane %v498, 2
        %v501 = vor.u32 %v497, %v500
        %v502 = vsel %vm485, %v493, %v501
        %vm505 = vcmask 1045504
        %v506 = vrot.slane %v462, 2
        %v507 = vrot.slane %v461, 2
        %v508 = vsel %vm505, %v506, %v507
        %v509 = vld [vmem:[#allocation9] sm:$0xff]
        %v510 = vld [vmem:[#allocation9 + $0x8] sm:$0xff]
        %v511 = vld [vmem:[#allocation9 + $0x10] sm:$0xff]
        %v512 = vld [vmem:[#allocation9 + $0x18] sm:$0xff]
        %v513 = vld [vmem:[#allocation9 + $0x20] sm:$0xff]
        %v514 = vld [vmem:[#allocation9 + $0x28] sm:$0xff]
        %v515 = vld [vmem:[#allocation9 + $0x30] sm:$0xff]
        %v516 = vld [vmem:[#allocation9 + $0x38] sm:$0xff]
        %v517 = vld [vmem:[#allocation9 + $0x40] sm:$0xff]
        %v518 = vld [vmem:[#allocation9 + $0x48] sm:$0xff]
        %v519 = vld [vmem:[#allocation9 + $0x50] sm:$0xff]
        %v520 = vld [vmem:[#allocation9 + $0x58] sm:$0xff]
        %v521 = vld [vmem:[#allocation9 + $0x60] sm:$0xff]
        %v522 = vld [vmem:[#allocation9 + $0x68] sm:$0xff]
        %v523 = vld [vmem:[#allocation9 + $0x70] sm:$0xff]
        %v524 = vld [vmem:[#allocation9 + $0x78] sm:$0xff]
        %v525 = vld [vmem:[#allocation9 + $0x80] sm:$0xff]
        %v526 = vld [vmem:[#allocation9 + $0x88] sm:$0xff]
        %v527 = vld [vmem:[#allocation9 + $0x90] sm:$0xff]
        %v528 = vld [vmem:[#allocation9 + $0x98] sm:$0xff]
        %v529 = vld [vmem:[#allocation9 + $0xa0] sm:$0xff]
        %v530 = vld [vmem:[#allocation9 + $0xa8] sm:$0xff]
        %v531 = vld [vmem:[#allocation9 + $0xb0] sm:$0xff]
        %v532 = vld [vmem:[#allocation9 + $0xb8] sm:$0xff]
        %v533 = vld [vmem:[#allocation9 + $0xc0] sm:$0xff]
        %v534 = vld [vmem:[#allocation9 + $0xc8] sm:$0xff]
        %v535 = vld [vmem:[#allocation9 + $0xd0] sm:$0xff]
        %v536 = vld [vmem:[#allocation9 + $0xd8] sm:$0xff]
        %v537 = vld [vmem:[#allocation9 + $0xe0] sm:$0xff]
        %v538 = vld [vmem:[#allocation9 + $0xe8] sm:$0xff]
        %v539 = vld [vmem:[#allocation9 + $0xf0] sm:$0xff]
        %v540 = vld [vmem:[#allocation9 + $0xf8] sm:$0xff]
        %v541 = vld [vmem:[#allocation9 + $0x100] sm:$0xff]
        %v542 = vld [vmem:[#allocation9 + $0x108] sm:$0xff]
        %v543 = vld [vmem:[#allocation9 + $0x110] sm:$0xff]
        %v544 = vld [vmem:[#allocation9 + $0x118] sm:$0xff]
        %v545 = vld [vmem:[#allocation9 + $0x120] sm:$0xff]
        %v546 = vld [vmem:[#allocation9 + $0x128] sm:$0xff]
        %v547 = vld [vmem:[#allocation9 + $0x130] sm:$0xff]
        %v548 = vld [vmem:[#allocation9 + $0x138] sm:$0xff]
        %v549 = vld [vmem:[#allocation9 + $0x140] sm:$0xff]
        %v550 = vld [vmem:[#allocation9 + $0x148] sm:$0xff]
        %v551 = vld [vmem:[#allocation9 + $0x150] sm:$0xff]
        %v552 = vld [vmem:[#allocation9 + $0x158] sm:$0xff]
        %v553 = vld [vmem:[#allocation9 + $0x160] sm:$0xff]
        %v554 = vld [vmem:[#allocation9 + $0x168] sm:$0xff]
        %v555 = vld [vmem:[#allocation9 + $0x170] sm:$0xff]
        %v556 = vld [vmem:[#allocation9 + $0x178] sm:$0xff]
        %v557 = vld [vmem:[#allocation9 + $0x180] sm:$0xff]
        %v558 = vld [vmem:[#allocation9 + $0x188] sm:$0xff]
        %v559 = vld [vmem:[#allocation9 + $0x190] sm:$0xff]
        %v560 = vld [vmem:[#allocation9 + $0x198] sm:$0xff]
        %v561 = vld [vmem:[#allocation9 + $0x1a0] sm:$0xff]
        %v562 = vld [vmem:[#allocation9 + $0x1a8] sm:$0xff]
        %v563 = vld [vmem:[#allocation9 + $0x1b0] sm:$0xff]
        %v564 = vld [vmem:[#allocation9 + $0x1b8] sm:$0xff]
        %v565 = vld [vmem:[#allocation9 + $0x1c0] sm:$0xff]
        %v566 = vld [vmem:[#allocation9 + $0x1c8] sm:$0xff]
        %v567 = vld [vmem:[#allocation9 + $0x1d0] sm:$0xff]
        %v568 = vld [vmem:[#allocation9 + $0x1d8] sm:$0xff]
        %v569 = vld [vmem:[#allocation9 + $0x1e0] sm:$0xff]
        %v570 = vld [vmem:[#allocation9 + $0x1e8] sm:$0xff]
        %v571 = vld [vmem:[#allocation9 + $0x1f0] sm:$0xff]
        %v572 = vld [vmem:[#allocation9 + $0x1f8] sm:$0xff]
        %v573 = vld [vmem:[#allocation9 + $0x200] sm:$0xff]
        %v574 = vld [vmem:[#allocation9 + $0x208] sm:$0xff]
        %v575 = vld [vmem:[#allocation9 + $0x210] sm:$0xff]
        %v576 = vld [vmem:[#allocation9 + $0x218] sm:$0xff]
        %v577 = vld [vmem:[#allocation9 + $0x220] sm:$0xff]
        %v578 = vld [vmem:[#allocation9 + $0x228] sm:$0xff]
        %v579 = vld [vmem:[#allocation9 + $0x230] sm:$0xff]
        %v580 = vld [vmem:[#allocation9 + $0x238] sm:$0xff]
        %v581 = vld [vmem:[#allocation9 + $0x240] sm:$0xff]
        %v582 = vld [vmem:[#allocation9 + $0x248] sm:$0xff]
        %v583 = vld [vmem:[#allocation9 + $0x250] sm:$0xff]
        %v584 = vld [vmem:[#allocation9 + $0x258] sm:$0xff]
        %v585 = vld [vmem:[#allocation9 + $0x260] sm:$0xff]
        %v586 = vld [vmem:[#allocation9 + $0x268] sm:$0xff]
        %v587 = vld [vmem:[#allocation9 + $0x270] sm:$0xff]
        %v588 = vld [vmem:[#allocation9 + $0x278] sm:$0xff]
        %vm591 = vcmask 1044480
        %v592 = vrot.slane %v457, 3
        %v593 = vrot.slane %v458, 3
        %v594 = vsel %vm591, %v592, %v593
        %v595 = vrot.slane %v475, 3
        %v596 = vrot.slane %v478, 3
        %v597 = vsel %vm591, %v595, %v596
        %v598 = vrot.slane %v484, 3
        %v599 = vrot.slane %v483, 3
        %v600 = vsel %vm591, %v598, %v599
        %v601 = vrot.slane %v502, 3
        %v602 = vrot.slane %v501, 3
        %v603 = vsel %vm591, %v601, %v602
        %v604 = vrot.slane %v508, 3
        %v605 = vrot.slane %v507, 3
        %v606 = vsel %vm591, %v604, %v605
        %v692 = vunpack.c.l.b16 %v509
        %v693 = vunpack.c.h.b16 %v509
        %v694 = vunpack.c.l.b16 %v510
        %v695 = vunpack.c.h.b16 %v510
        %v696 = vunpack.c.l.b16 %v511
        %v697 = vunpack.c.h.b16 %v511
        %v698 = vunpack.c.l.b16 %v512
        %v699 = vunpack.c.h.b16 %v512
        %v700 = vunpack.c.l.b16 %v513
        %v701 = vunpack.c.h.b16 %v513
        %v702 = vunpack.c.l.b16 %v514
        %v703 = vunpack.c.h.b16 %v514
        %v704 = vunpack.c.l.b16 %v515
        %v705 = vunpack.c.h.b16 %v515
        %v706 = vunpack.c.l.b16 %v516
        %v707 = vunpack.c.h.b16 %v516
        %v708 = vunpack.c.l.b16 %v517
        %v709 = vunpack.c.h.b16 %v517
        %v710 = vunpack.c.l.b16 %v518
        %v711 = vunpack.c.h.b16 %v518
        %v712 = vunpack.c.l.b16 %v519
        %v713 = vunpack.c.h.b16 %v519
        %v714 = vunpack.c.l.b16 %v520
        %v715 = vunpack.c.h.b16 %v520
        %v716 = vunpack.c.l.b16 %v521
        %v717 = vunpack.c.h.b16 %v521
        %v718 = vunpack.c.l.b16 %v522
        %v719 = vunpack.c.h.b16 %v522
        %v720 = vunpack.c.l.b16 %v523
        %v721 = vunpack.c.h.b16 %v523
        %v722 = vunpack.c.l.b16 %v524
        %v723 = vunpack.c.h.b16 %v524
        %v724 = vunpack.c.l.b16 %v525
        %v725 = vunpack.c.h.b16 %v525
        %v726 = vunpack.c.l.b16 %v526
        %v727 = vunpack.c.h.b16 %v526
        %v728 = vunpack.c.l.b16 %v527
        %v729 = vunpack.c.h.b16 %v527
        %v730 = vunpack.c.l.b16 %v528
        %v731 = vunpack.c.h.b16 %v528
        %v732 = vunpack.c.l.b16 %v529
        %v733 = vunpack.c.h.b16 %v529
        %v734 = vunpack.c.l.b16 %v530
        %v735 = vunpack.c.h.b16 %v530
        %v736 = vunpack.c.l.b16 %v531
        %v737 = vunpack.c.h.b16 %v531
        %v738 = vunpack.c.l.b16 %v532
        %v739 = vunpack.c.h.b16 %v532
        %v740 = vunpack.c.l.b16 %v533
        %v741 = vunpack.c.h.b16 %v533
        %v742 = vunpack.c.l.b16 %v534
        %v743 = vunpack.c.h.b16 %v534
        %v744 = vunpack.c.l.b16 %v535
        %v745 = vunpack.c.h.b16 %v535
        %v746 = vunpack.c.l.b16 %v536
        %v747 = vunpack.c.h.b16 %v536
        %v748 = vunpack.c.l.b16 %v537
        %v749 = vunpack.c.h.b16 %v537
        %v750 = vunpack.c.l.b16 %v538
        %v751 = vunpack.c.h.b16 %v538
        %v752 = vunpack.c.l.b16 %v539
        %v753 = vunpack.c.h.b16 %v539
        %v754 = vunpack.c.l.b16 %v540
        %v755 = vunpack.c.h.b16 %v540
        %v756 = vunpack.c.l.b16 %v541
        %v757 = vunpack.c.h.b16 %v541
        %v758 = vunpack.c.l.b16 %v542
        %v759 = vunpack.c.h.b16 %v542
        %v760 = vunpack.c.l.b16 %v543
        %v761 = vunpack.c.h.b16 %v543
        %v762 = vunpack.c.l.b16 %v544
        %v763 = vunpack.c.h.b16 %v544
        %v764 = vunpack.c.l.b16 %v545
        %v765 = vunpack.c.h.b16 %v545
        %v766 = vunpack.c.l.b16 %v546
        %v767 = vunpack.c.h.b16 %v546
        %v768 = vunpack.c.l.b16 %v547
        %v769 = vunpack.c.h.b16 %v547
        %v770 = vunpack.c.l.b16 %v548
        %v771 = vunpack.c.h.b16 %v548
        %v772 = vunpack.c.l.b16 %v549
        %v773 = vunpack.c.h.b16 %v549
        %v774 = vunpack.c.l.b16 %v550
        %v775 = vunpack.c.h.b16 %v550
        %v776 = vunpack.c.l.b16 %v551
        %v777 = vunpack.c.h.b16 %v551
        %v778 = vunpack.c.l.b16 %v552
        %v779 = vunpack.c.h.b16 %v552
        %v780 = vunpack.c.l.b16 %v553
        %v781 = vunpack.c.h.b16 %v553
        %v782 = vunpack.c.l.b16 %v554
        %v783 = vunpack.c.h.b16 %v554
        %v784 = vunpack.c.l.b16 %v555
        %v785 = vunpack.c.h.b16 %v555
        %v786 = vunpack.c.l.b16 %v556
        %v787 = vunpack.c.h.b16 %v556
        %v788 = vunpack.c.l.b16 %v557
        %v789 = vunpack.c.h.b16 %v557
        %v790 = vunpack.c.l.b16 %v558
        %v791 = vunpack.c.h.b16 %v558
        %v792 = vunpack.c.l.b16 %v559
        %v793 = vunpack.c.h.b16 %v559
        %v794 = vunpack.c.l.b16 %v560
        %v795 = vunpack.c.h.b16 %v560
        %v796 = vunpack.c.l.b16 %v561
        %v797 = vunpack.c.h.b16 %v561
        %v798 = vunpack.c.l.b16 %v562
        %v799 = vunpack.c.h.b16 %v562
        %v800 = vunpack.c.l.b16 %v563
        %v801 = vunpack.c.h.b16 %v563
        %v802 = vunpack.c.l.b16 %v564
        %v803 = vunpack.c.h.b16 %v564
        %v804 = vunpack.c.l.b16 %v565
        %v805 = vunpack.c.h.b16 %v565
        %v806 = vunpack.c.l.b16 %v566
        %v807 = vunpack.c.h.b16 %v566
        %v808 = vunpack.c.l.b16 %v567
        %v809 = vunpack.c.h.b16 %v567
        %v810 = vunpack.c.l.b16 %v568
        %v811 = vunpack.c.h.b16 %v568
        %v812 = vunpack.c.l.b16 %v569
        %v813 = vunpack.c.h.b16 %v569
        %v814 = vunpack.c.l.b16 %v570
        %v815 = vunpack.c.h.b16 %v570
        %v816 = vunpack.c.l.b16 %v571
        %v817 = vunpack.c.h.b16 %v571
        %v818 = vunpack.c.l.b16 %v572
        %v819 = vunpack.c.h.b16 %v572
        %v820 = vunpack.c.l.b16 %v573
        %v821 = vunpack.c.h.b16 %v573
        %v822 = vunpack.c.l.b16 %v574
        %v823 = vunpack.c.h.b16 %v574
        %v824 = vunpack.c.l.b16 %v575
        %v825 = vunpack.c.h.b16 %v575
        %v826 = vunpack.c.l.b16 %v576
        %v827 = vunpack.c.h.b16 %v576
        %v828 = vunpack.c.l.b16 %v577
        %v829 = vunpack.c.h.b16 %v577
        %v830 = vunpack.c.l.b16 %v578
        %v831 = vunpack.c.h.b16 %v578
        %v832 = vunpack.c.l.b16 %v579
        %v833 = vunpack.c.h.b16 %v579
        %v834 = vunpack.c.l.b16 %v580
        %v835 = vunpack.c.h.b16 %v580
        %v836 = vunpack.c.l.b16 %v581
        %v837 = vunpack.c.h.b16 %v581
        %v838 = vunpack.c.l.b16 %v582
        %v839 = vunpack.c.h.b16 %v582
        %v840 = vunpack.c.l.b16 %v583
        %v841 = vunpack.c.h.b16 %v583
        %v842 = vunpack.c.l.b16 %v584
        %v843 = vunpack.c.h.b16 %v584
        %v844 = vunpack.c.l.b16 %v585
        %v845 = vunpack.c.h.b16 %v585
        %v846 = vunpack.c.l.b16 %v586
        %v847 = vunpack.c.h.b16 %v586
        %v848 = vunpack.c.l.b16 %v587
        %v849 = vunpack.c.h.b16 %v587
        %v850 = vunpack.c.l.b16 %v588
        %v851 = vunpack.c.h.b16 %v588
        %v852 = vpack.c.b16 %v694, %v692
        %v853 = vpack.c.b16 %v695, %v693
        %v854 = vpack.c.b16 %v698, %v696
        %v855 = vpack.c.b16 %v699, %v697
        %v856 = vpack.c.b16 %v702, %v700
        %v857 = vpack.c.b16 %v703, %v701
        %v858 = vpack.c.b16 %v706, %v704
        %v859 = vpack.c.b16 %v707, %v705
        %v860 = vpack.c.b16 %v710, %v708
        %v861 = vpack.c.b16 %v711, %v709
        %v862 = vpack.c.b16 %v714, %v712
        %v863 = vpack.c.b16 %v715, %v713
        %v864 = vpack.c.b16 %v718, %v716
        %v865 = vpack.c.b16 %v719, %v717
        %v866 = vpack.c.b16 %v722, %v720
        %v867 = vpack.c.b16 %v723, %v721
        %v868 = vpack.c.b16 %v726, %v724
        %v869 = vpack.c.b16 %v727, %v725
        %v870 = vpack.c.b16 %v730, %v728
        %v871 = vpack.c.b16 %v731, %v729
        %v872 = vpack.c.b16 %v734, %v732
        %v873 = vpack.c.b16 %v735, %v733
        %v874 = vpack.c.b16 %v738, %v736
        %v875 = vpack.c.b16 %v739, %v737
        %v876 = vpack.c.b16 %v742, %v740
        %v877 = vpack.c.b16 %v743, %v741
        %v878 = vpack.c.b16 %v746, %v744
        %v879 = vpack.c.b16 %v747, %v745
        %v880 = vpack.c.b16 %v750, %v748
        %v881 = vpack.c.b16 %v751, %v749
        %v882 = vpack.c.b16 %v754, %v752
        %v883 = vpack.c.b16 %v755, %v753
        %v884 = vpack.c.b16 %v758, %v756
        %v885 = vpack.c.b16 %v759, %v757
        %v886 = vpack.c.b16 %v762, %v760
        %v887 = vpack.c.b16 %v763, %v761
        %v888 = vpack.c.b16 %v766, %v764
        %v889 = vpack.c.b16 %v767, %v765
        %v890 = vpack.c.b16 %v770, %v768
        %v891 = vpack.c.b16 %v771, %v769
        %v892 = vpack.c.b16 %v774, %v772
        %v893 = vpack.c.b16 %v775, %v773
        %v894 = vpack.c.b16 %v778, %v776
        %v895 = vpack.c.b16 %v779, %v777
        %v896 = vpack.c.b16 %v782, %v780
        %v897 = vpack.c.b16 %v783, %v781
        %v898 = vpack.c.b16 %v786, %v784
        %v899 = vpack.c.b16 %v787, %v785
        %v900 = vpack.c.b16 %v790, %v788
        %v901 = vpack.c.b16 %v791, %v789
        %v902 = vpack.c.b16 %v794, %v792
        %v903 = vpack.c.b16 %v795, %v793
        %v904 = vpack.c.b16 %v798, %v796
        %v905 = vpack.c.b16 %v799, %v797
        %v906 = vpack.c.b16 %v802, %v800
        %v907 = vpack.c.b16 %v803, %v801
        %v908 = vpack.c.b16 %v806, %v804
        %v909 = vpack.c.b16 %v807, %v805
        %v910 = vpack.c.b16 %v810, %v808
        %v911 = vpack.c.b16 %v811, %v809
        %v912 = vpack.c.b16 %v814, %v812
        %v913 = vpack.c.b16 %v815, %v813
        %v914 = vpack.c.b16 %v818, %v816
        %v915 = vpack.c.b16 %v819, %v817
        %v916 = vpack.c.b16 %v822, %v820
        %v917 = vpack.c.b16 %v823, %v821
        %v918 = vpack.c.b16 %v826, %v824
        %v919 = vpack.c.b16 %v827, %v825
        %v920 = vpack.c.b16 %v830, %v828
        %v921 = vpack.c.b16 %v831, %v829
        %v922 = vpack.c.b16 %v834, %v832
        %v923 = vpack.c.b16 %v835, %v833
        %v924 = vpack.c.b16 %v838, %v836
        %v925 = vpack.c.b16 %v839, %v837
        %v926 = vpack.c.b16 %v842, %v840
        %v927 = vpack.c.b16 %v843, %v841
        %v928 = vpack.c.b16 %v846, %v844
        %v929 = vpack.c.b16 %v847, %v845
        %v930 = vpack.c.b16 %v850, %v848
        %v931 = vpack.c.b16 %v851, %v849
        %1012 = vmatprep.subr.bf16.mxu0 %v853
        %1013 = vmatpush1.bf16.msra.mxu0 %v852
        %1014 = vmatprep.subr.bf16.mxu0 %v855
        %1015 = vmatpush1.bf16.msra.mxu0 %v854
        %1016 = vmatprep.subr.bf16.mxu0 %v857
        %1017 = vmatpush1.bf16.msra.mxu0 %v856
        %1018 = vmatprep.subr.bf16.mxu0 %v859
        %1019 = vmatpush1.bf16.msra.mxu0 %v858
        %1020 = vmatprep.subr.bf16.mxu0 %v861
        %1021 = vmatpush1.bf16.msra.mxu0 %v860
        %1022 = vmatprep.subr.bf16.mxu0 %v863
        %1023 = vmatpush1.bf16.msra.mxu0 %v862
        %1024 = vmatprep.subr.bf16.mxu0 %v865
        %1025 = vmatpush1.bf16.msra.mxu0 %v864
        %1026 = vmatprep.subr.bf16.mxu0 %v867
        %1027 = vmatpush1.bf16.msra.mxu0 %v866
        %1028 = vmatprep.subr.bf16.mxu0 %v869
        %1029 = vmatpush1.bf16.msra.mxu0 %v868
        %1030 = vmatprep.subr.bf16.mxu0 %v871
        %1031 = vmatpush1.bf16.msra.mxu0 %v870
        %1032 = vmatprep.subr.bf16.mxu0 %v873
        %1033 = vmatpush1.bf16.msra.mxu0 %v872
        %1034 = vmatprep.subr.bf16.mxu0 %v875
        %1035 = vmatpush1.bf16.msra.mxu0 %v874
        %1036 = vmatprep.subr.bf16.mxu0 %v877
        %1037 = vmatpush1.bf16.msra.mxu0 %v876
        %1038 = vmatprep.subr.bf16.mxu0 %v879
        %1039 = vmatpush1.bf16.msra.mxu0 %v878
        %1040 = vmatprep.subr.bf16.mxu0 %v881
        %1041 = vmatpush1.bf16.msra.mxu0 %v880
        %1042 = vmatprep.subr.bf16.mxu0 %v883
        %1043 = vmatpush1.bf16.msra.mxu0 %v882
        %1044 = vmatprep.mubr.bf16.mxu0 %v597
        %1045 = vmatmul.mubr.bf16.gmra.mrb[0].mxu0 %v594
        %v1046 = vpop.f32.mrb[0].mxu0
        %v1047 = vadd.f32 0.0, %v1046
        %v1048 = vpop.f32.mrb[0].mxu0
        %v1049 = vadd.f32 0.0, %v1048
        %v1050 = vpop.f32.mrb[0].mxu0
        %v1051 = vadd.f32 0.0, %v1050
        %v1052 = vpop.f32.mrb[0].mxu0
        %v1053 = vadd.f32 0.0, %v1052
        %1054 = vdwg.mxu0
        %1055 = vmatprep.subr.bf16.mxu0 %v885
        %1056 = vmatpush1.bf16.msra.mxu0 %v884
        %1057 = vmatprep.subr.bf16.mxu0 %v887
        %1058 = vmatpush1.bf16.msra.mxu0 %v886
        %1059 = vmatprep.subr.bf16.mxu0 %v889
        %1060 = vmatpush1.bf16.msra.mxu0 %v888
        %1061 = vmatprep.subr.bf16.mxu0 %v891
        %1062 = vmatpush1.bf16.msra.mxu0 %v890
        %1063 = vmatprep.subr.bf16.mxu0 %v893
        %1064 = vmatpush1.bf16.msra.mxu0 %v892
        %1065 = vmatprep.subr.bf16.mxu0 %v895
        %1066 = vmatpush1.bf16.msra.mxu0 %v894
        %1067 = vmatprep.subr.bf16.mxu0 %v897
        %1068 = vmatpush1.bf16.msra.mxu0 %v896
        %1069 = vmatprep.subr.bf16.mxu0 %v899
        %1070 = vmatpush1.bf16.msra.mxu0 %v898
        %1071 = vmatprep.subr.bf16.mxu0 %v901
        %1072 = vmatpush1.bf16.msra.mxu0 %v900
        %1073 = vmatprep.subr.bf16.mxu0 %v903
        %1074 = vmatpush1.bf16.msra.mxu0 %v902
        %1075 = vmatprep.subr.bf16.mxu0 %v905
        %1076 = vmatpush1.bf16.msra.mxu0 %v904
        %1077 = vmatprep.subr.bf16.mxu0 %v907
        %1078 = vmatpush1.bf16.msra.mxu0 %v906
        %1079 = vmatprep.subr.bf16.mxu0 %v909
        %1080 = vmatpush1.bf16.msra.mxu0 %v908
        %1081 = vmatprep.subr.bf16.mxu0 %v911
        %1082 = vmatpush1.bf16.msra.mxu0 %v910
        %1083 = vmatprep.subr.bf16.mxu0 %v913
        %1084 = vmatpush1.bf16.msra.mxu0 %v912
        %1085 = vmatprep.subr.bf16.mxu0 %v915
        %1086 = vmatpush1.bf16.msra.mxu0 %v914
        %1087 = vmatprep.mubr.bf16.mxu0 %v603
        %1088 = vmatmul.mubr.bf16.gmra.mrb[0].mxu0 %v600
        %v1089 = vpop.f32.mrb[0].mxu0
        %v1090 = vadd.f32 %v1047, %v1089
        %v1091 = vpop.f32.mrb[0].mxu0
        %v1092 = vadd.f32 %v1049, %v1091
        %v1093 = vpop.f32.mrb[0].mxu0
        %v1094 = vadd.f32 %v1051, %v1093
        %v1095 = vpop.f32.mrb[0].mxu0
        %v1096 = vadd.f32 %v1053, %v1095
        %1097 = vdwg.mxu0
        %1098 = vmatprep.subr.bf16.mxu0 %v917
        %1099 = vmatpush1.bf16.msra.mxu0 %v916
        %1100 = vmatprep.subr.bf16.mxu0 %v919
        %1101 = vmatpush1.bf16.msra.mxu0 %v918
        %1102 = vmatprep.subr.bf16.mxu0 %v921
        %1103 = vmatpush1.bf16.msra.mxu0 %v920
        %1104 = vmatprep.subr.bf16.mxu0 %v923
        %1105 = vmatpush1.bf16.msra.mxu0 %v922
        %1106 = vmatprep.subr.bf16.mxu0 %v925
        %1107 = vmatpush1.bf16.msra.mxu0 %v924
        %1108 = vmatprep.subr.bf16.mxu0 %v927
        %1109 = vmatpush1.bf16.msra.mxu0 %v926
        %1110 = vmatprep.subr.bf16.mxu0 %v929
        %1111 = vmatpush1.bf16.msra.mxu0 %v928
        %1112 = vmatprep.subr.bf16.mxu0 %v931
        %1113 = vmatpush1.bf16.msra.mxu0 %v930
        %1114 = vmatprep.subr.bf16.mxu0 0
        %1115 = vmatpush1.bf16.msra.mxu0 0
        %1116 = vmatprep.subr.bf16.mxu0 0
        %1117 = vmatpush1.bf16.msra.mxu0 0
        %1118 = vmatprep.subr.bf16.mxu0 0
        %1119 = vmatpush1.bf16.msra.mxu0 0
        %1120 = vmatprep.subr.bf16.mxu0 0
        %1121 = vmatpush1.bf16.msra.mxu0 0
        %1122 = vmatprep.subr.bf16.mxu0 0
        %1123 = vmatpush1.bf16.msra.mxu0 0
        %1124 = vmatprep.subr.bf16.mxu0 0
        %1125 = vmatpush1.bf16.msra.mxu0 0
        %1126 = vmatprep.subr.bf16.mxu0 0
        %1127 = vmatpush1.bf16.msra.mxu0 0
        %1128 = vmatprep.subr.bf16.mxu0 0
        %1129 = vmatpush1.bf16.msra.mxu0 0
        %1130 = vmatprep.mubr.bf16.mxu0 0
        %1131 = vmatmul.mubr.bf16.gmra.mrb[0].mxu0 %v606
        %v1132 = vpop.f32.mrb[0].mxu0
        %v1133 = vadd.f32 %v1090, %v1132
        %v1134 = vpop.f32.mrb[0].mxu0
        %v1135 = vadd.f32 %v1092, %v1134
        %v1136 = vpop.f32.mrb[0].mxu0
        %v1137 = vadd.f32 %v1094, %v1136
        %v1138 = vpop.f32.mrb[0].mxu0
        %v1139 = vadd.f32 %v1096, %v1138
        %1140 = vdwg.mxu0
        %v1141 = vld [vmem:[%s4] sm:$0x3]
        %v1143 = vlaneseq
        %v1144 = vshrl.u32 %v1143, 7
        %v1145 = vsub.s32 0, %v1144
        %v1146 = vrot.slane %v1141, %v1145
        %v1147 = vlaneseq
        %v1148 = vshrl.u32 %v1147, 7
        %v1149 = vsub.s32 1, %v1148
        %v1150 = vrot.slane %v1141, %v1149
        %v1153 = vmul.f32 %v1133, %v1146
        %v1154 = vmul.f32 %v1135, %v1150
        %v1155 = vmul.f32 %v1137, %v1146
        %v1156 = vmul.f32 %v1139, %v1150
        %v1157 = vld [vmem:[%s5] sm:$0x3]
        %v1159 = vlaneseq
        %v1160 = vshrl.u32 %v1159, 7
        %v1161 = vsub.s32 0, %v1160
        %v1162 = vrot.slane %v1157, %v1161
        %v1163 = vlaneseq
        %v1164 = vshrl.u32 %v1163, 7
        %v1165 = vsub.s32 1, %v1164
        %v1166 = vrot.slane %v1157, %v1165
        %v1169 = vadd.f32 %v1153, %v1162
        %v1170 = vadd.f32 %v1154, %v1166
        %v1171 = vadd.f32 %v1155, %v1162
        %v1172 = vadd.f32 %v1156, %v1166
        %v1173 = vtanh.pop %v1169
        %v1174 = vtanh.pop %v1170
        %v1175 = vtanh.pop %v1171
        %v1176 = vtanh.pop %v1172
        %p1177 = scmp.le.s32.totalorder %s431, 40
        // Predicated region
        $region61: #{tpu_custom_call.1} parent=43 // pred_check
          %p1178 = pneg %p1177
        $region62: #{tpu_custom_call.1} parent=43 // pred_check_branch
          %1180 = sbr.rel (%p1178) target = $region64
        $region63: #{tpu_custom_call.1} parent=43 // pred_region
          %v1181 = vpack.c.bf16 %v1175, %v1173
          %v1182 = vpack.c.bf16 %v1176, %v1174
          %v1185 = vunpack.c.l.b16 %v1181
          %v1186 = vunpack.c.l.b16 %v1182
          %v1187 = vunpack.c.h.b16 %v1181
          %v1188 = vunpack.c.h.b16 %v1182
          %v1189 = vpack.c.b16 %v1186, %v1185
          %v1190 = vpack.c.b16 %v1188, %v1187
          %1193 = vst [vmem:[%s405] sm:$0xff] %v1189
          %1194 = vst [vmem:[%s405 + $0x8] sm:$0xff] %v1190
        $region64: #{tpu_custom_call.1} parent=43 // pred_fallthru
          _
        %p1195 = scmp.gt.s32.totalorder %s431, 40
        // Predicated region
        $region65: #{tpu_custom_call.1} parent=43 // pred_check
          %p1196 = pneg %p1195
        $region66: #{tpu_custom_call.1} parent=43 // pred_check_branch
          %1198 = sbr.rel (%p1196) target = $region68
        $region67: #{tpu_custom_call.1} parent=43 // pred_region
          %v1199 = vadd.s32 %v418, 8
          %v1200 = vstv %s420
          %v1201 = vadd.s32 %v418, %v1200
          %v1202 = vadd.s32 %v1199, %v1200
          %vm1203 = vcmp.lt.s32.totalorder %v1201, 40
          %vm1204 = vcmp.lt.s32.totalorder %v1202, 40
          %v1205 = vsel %vm1203, 1, 0
          %v1206 = vsel %vm1204, 1, 0
          %vm1207 = vcmp.eq.s32.totalorder %v1205, 1
          %vm1208 = vcmp.eq.s32.totalorder %v1206, 1
          %v1209 = vsel %vm1207, %v1173, 0.0
          %v1210 = vsel %vm1207, %v1174, 0.0
          %v1211 = vsel %vm1208, %v1175, 0.0
          %v1212 = vsel %vm1208, %v1176, 0.0
          %v1213 = vpack.c.bf16 %v1211, %v1209
          %v1214 = vpack.c.bf16 %v1212, %v1210
          %v1217 = vunpack.c.l.b16 %v1213
          %v1218 = vunpack.c.l.b16 %v1214
          %v1219 = vunpack.c.h.b16 %v1213
          %v1220 = vunpack.c.h.b16 %v1214
          %v1221 = vpack.c.b16 %v1218, %v1217
          %v1222 = vpack.c.b16 %v1220, %v1219
          %1225 = vst [vmem:[%s405] sm:$0xff] %v1221
          %1226 = vst [vmem:[%s405 + $0x8] sm:$0xff] %v1222
        $region68: #{tpu_custom_call.1} parent=43 // pred_fallthru
          _
        %s1227 = sand.u32 %s212, 1
        %s1228 = scalar_lea.sflag [#allocation5], %s1227
        %s1229 = sand.u32 %s212, 1
        %s1230 = smul.addr %s1229, 16
        %s1231 = scalar_lea.vmem [#allocation11], %s1230
        // Predicated region
        $region69: #{tpu_custom_call.1} parent=43 // pred_check
          %p1232 = pneg %p222
        $region70: #{tpu_custom_call.1} parent=43 // pred_check_branch
          %1234 = sbr.rel (%p1232) target = $region72
        $region71: #{tpu_custom_call.1} parent=43 // pred_region
          %s1235 = smul.u32 2, %s32
          %s1237 = ssub.s32 256, 256
          %1238 = vsyncadd %s1228, %s1237
          %s1239 = smul.addr %s1235, 2
          %s1240 = smul.addr %s31, 12
          %s1241 = sadd.s32 %s1239, %s1240
          %s1242 = smul.addr %s1241, 64
          %s1243 = scalar_lea.hbm %s6, %s1242
          %s1244 = sshll.u32 %s1231, 4
          %s1245 = int_to_ptr.vmem [resolvable:$true] %s1244
          %1250 = dma.vmem_to_hbm [thread:$0]  %s1245, 256, %s1243, %s1228, 128, 128, 8
        $region72: #{tpu_custom_call.1} parent=43 // pred_fallthru
          _
      $region44: #{tpu_custom_call.1} parent=5 // pred_fallthru
        _
      %p1251 = scmp.le.s32.totalorder 2, %s22
      // Predicated region
      $region73: #{tpu_custom_call.1} parent=5 // pred_check
        %p1252 = pneg %p1251
      $region74: #{tpu_custom_call.1} parent=5 // pred_check_branch
        %1254 = sbr.rel (%p1252) target = $region76
      $region75: #{tpu_custom_call.1} parent=5 // pred_region
        %s1255 = ssub.s32 %s22, 2
        // Predicated region
        $region77: #{tpu_custom_call.1} parent=75 // pred_check
          %p1256 = pneg %p228
        $region78: #{tpu_custom_call.1} parent=75 // pred_check_branch
          %1258 = sbr.rel (%p1256) target = $region80
        $region79: #{tpu_custom_call.1} parent=75 // pred_region
          %s1259 = sand.u32 %s213, 1
          %s1260 = scalar_lea.sflag [#allocation5], %s1259
          %s1261 = sand.u32 %s213, 1
          %s1262 = smul.addr %s1261, 16
          %s1263 = scalar_lea.vmem [#allocation11], %s1262
          %1264 = dma.done %s1260, 256
        $region80: #{tpu_custom_call.1} parent=75 // pred_fallthru
          _
      $region76: #{tpu_custom_call.1} parent=5 // pred_fallthru
        _
    $region6: #{tpu_custom_call.1} parent=1 // loop_footer
      %s26 = sadd.s32 1, %s22
    $region7: #{tpu_custom_call.1} parent=1 // loop_footer_branch
      %21 = sbr.rel target = $region3
    $region8: #{tpu_custom_call.1} parent=1 // loop_exit
      _
    %1265 = vsyncpa [#allocation4], 1
    %s1266 = scalar_lea.sflag [#allocation4], 1
    %1267 = vsyncpa %s1266, 1
    %1268 = vsyncpa [#allocation7], 1
    %s1269 = scalar_lea.sflag [#allocation7], 1
    %1270 = vsyncpa %s1269, 1
    %1271 = vsyncpa [#allocation10], 1
    %1272 = vsyncpa [#allocation5], 1
    %s1273 = scalar_lea.sflag [#allocation5], 1
    %1274 = vsyncpa %s1273, 1

// kernel: tpu_custom_call.1
$region0: #{tpu_custom_call.1}
  #allocation0 [shape = 'u32[]', space=smem, size = 0x4, offset = 0x4, fixed_abs, tag = 'smem constant byte address 0x4 - core index']
  #allocation1 [shape = 'u32[144,128]{1,0:T(1,128)}', space=vmem, size = 0x12000, scoped, tag = 'internal scratch']
  #allocation2 [shape = 'bf16[32,128]{1,0:T(16,128)(2,1)}', space=vmem, size = 0x2000, scoped, tag = 'scratch operand']
  %s0 = inlined_call_operand.hbm [shape: bf16[2,48,128], index: 0, kind: input, shape index: {}]
  %s1 = inlined_call_operand.hbm [shape: bf16[2,48,128], index: 1, kind: input, shape index: {}]
  %s2 = inlined_call_operand.hbm [shape: bf16[2,48,128], index: 2, kind: input, shape index: {}]
  %s3 = inlined_call_operand.hbm [shape: bf16[640,256], index: 3, kind: input, shape index: {}]
  %s4 = inlined_call_operand.vmem [shape: f32[1,256], index: 4, kind: input, shape index: {}]
  %s5 = inlined_call_operand.vmem [shape: f32[1,256], index: 5, kind: input, shape index: {}]
  %s6 = inlined_call_operand.hbm [shape: bf16[2,48,256], index: 6, kind: output, shape index: {}]
  %s7 = sld [smem:[#allocation0]]
  $region81: #{tpu_custom_call.1} parent=0
    _
  %s9 = ssub.s32 1, %s7
  %s10 = scalar_select 0, %s9, %s7
  $region1: #{tpu_custom_call.1} parent=0
    #allocation3 [shape = 'u8[4096]{0}', space=vmem, size = 0x1000, scoped, tag = 'input window, operand 0']
    #allocation4 [shape = 's32[2]{0}', space=sflag, size = 0x8, scoped, tag = 'scoped memory for tpu_custom_call.1']
    #allocation5 [shape = 's32[2]{0}', space=sflag, size = 0x8, scoped, tag = 'scoped memory for tpu_custom_call.1']
    #allocation6 [shape = 'u8[8192]{0}', space=vmem, size = 0x2000, scoped, tag = 'input window, operand 1']
    #allocation7 [shape = 's32[2]{0}', space=sflag, size = 0x8, scoped, tag = 'scoped memory for tpu_custom_call.1']
    #allocation8 [shape = 'u8[4096]{0}', space=vmem, size = 0x1000, scoped, tag = 'input window, operand 2']
    #allocation9 [shape = 'u8[327680]{0}', space=vmem, size = 0x50000, scoped, tag = 'input window, operand 3, single buffered']
    #allocation10 [shape = 's32[1]{0}', space=sflag, size = 0x4, scoped, tag = 'scoped memory for tpu_custom_call.1']
    #allocation11 [shape = 'u8[16384]{0}', space=vmem, size = 0x4000, scoped, tag = 'output window, operand 0']
    %11 = vsyncpa [#allocation4], 0
    %s12 = scalar_lea.sflag [#allocation4], 1
    %13 = vsyncpa %s12, 0
    %14 = vsyncpa [#allocation7], 0
    %s15 = scalar_lea.sflag [#allocation7], 1
    %16 = vsyncpa %s15, 0
    %17 = vsyncpa [#allocation10], 0
    %18 = vsyncpa [#allocation5], 0
    %s19 = scalar_lea.sflag [#allocation5], 1
    %20 = vsyncpa %s19, 0
    loop: start=0, step=1, limit=8
    $region2: #{tpu_custom_call.1} parent=1 // loop_pre_header
      _
    $region3: #{tpu_custom_call.1} parent=1 // loop_header
      %s22 = sphi 0, %s26
      %p23 = scmp.ge.s32.totalorder %s22, 8
      %s29 = sphi 0, %s41
      %s30 = sphi 0, %s37
      %s31 = sphi 0, %s29
      %s32 = sphi 0, %s30
      %s33 = sphi 0, %s31
      %s34 = sphi 0, %s32
      %s54 = sphi 0, %s56
      %s57 = sphi 0, %s54
      %s58 = sphi 0, %s57
      %s74 = sphi 0, %s58
      %s82 = sphi 0, %s84
      %s85 = sphi 0, %s82
      %s86 = sphi 0, %s85
      %s102 = sphi 0, %s86
      %s118 = sphi 0, %s120
      %s121 = sphi 0, %s118
      %s122 = sphi 0, %s121
      %s138 = sphi 0, %s122
      %s142 = sphi 0, %s142
      %s144 = sphi 0, %s142
      %s145 = sphi 0, %s144
      %s159 = sphi 0, %s145
      %s163 = sphi 0, %s163
      %s165 = sphi 0, %s163
      %s166 = sphi 0, %s165
      %s180 = sphi 0, %s166
      %s184 = sphi 0, %s184
      %s186 = sphi 0, %s184
      %s187 = sphi 0, %s186
      %s201 = sphi 0, %s187
      %s209 = sphi 0, %s211
      %s212 = sphi 0, %s209
      %s213 = sphi 0, %s212
      %s229 = sphi 0, %s213
    $region4: #{tpu_custom_call.1} parent=1 // loop_header_branch
      %25 = sbr.rel (%p23) target = $region8
    $region5: #{tpu_custom_call.1} parent=1 // loop_body
      %s27 = ssub.s32 %s22, 1
      %s28 = ssub.s32 %s22, 2
      %s35 = sadd.s32 1, %s30
      %p36 = scmp.ge.s32.totalorder %s35, 3
      %s37 = scalar_select %p36, 0, %s35
      %s38 = sadd.s32 1, %s29
      %s39 = scalar_select %p36, %s38, %s29
      %p40 = scmp.ge.s32.totalorder %s39, 2
      %s41 = scalar_select %p40, 0, %s39
      %s42 = smul.u32 %s30, 2
      %s43 = ssub.s32 %s42, 1
      %p44 = scmp.gt.s32.totalorder %s43, 0
      %s45 = scalar_select %p44, %s43, 0
      %s46 = smul.u32 %s37, 2
      %s47 = ssub.s32 %s46, 1
      %p48 = scmp.gt.s32.totalorder %s47, 0
      %s49 = scalar_select %p48, %s47, 0
      %s50 = ssub.s32 %s29, %s41
      %s51 = ssub.s32 %s45, %s49
      %s52 = sor.u32 %s50, %s51
      %p53 = scmp.eq.s32.totalorder %s52, 0
      %s55 = sadd.s32 %s54, 1
      %s56 = scalar_select %p53, %s54, %s55
      %p59 = pneg %p53
      %p60 = scmp.eq.s32.totalorder %s22, 5
      %p61 = por %p59, %p60
      %p62 = scmp.ne.s32.totalorder %s54, %s57
      %p63 = scmp.eq.s32.totalorder %s22, 0
      %p64 = por %p62, %p63
      %p65 = scmp.ne.s32.totalorder %s54, %s57
      %p66 = scmp.eq.s32.totalorder %s27, 5
      %p67 = por %p65, %p66
      %p68 = scmp.ne.s32.totalorder %s57, %s58
      %p69 = scmp.eq.s32.totalorder %s27, 0
      %p70 = por %p68, %p69
      %p71 = scmp.ne.s32.totalorder %s57, %s58
      %p72 = scmp.eq.s32.totalorder %s28, 5
      %p73 = por %p71, %p72
      %p75 = scmp.ne.s32.totalorder %s58, %s74
      %p76 = scmp.eq.s32.totalorder %s28, 0
      %p77 = por %p75, %p76
      %s78 = ssub.s32 %s29, %s41
      %s79 = ssub.s32 %s30, %s37
      %s80 = sor.u32 %s78, %s79
      %p81 = scmp.eq.s32.totalorder %s80, 0
      %s83 = sadd.s32 %s82, 1
      %s84 = scalar_select %p81, %s82, %s83
      %p87 = pneg %p81
      %p88 = scmp.eq.s32.totalorder %s22, 5
      %p89 = por %p87, %p88
      %p90 = scmp.ne.s32.totalorder %s82, %s85
      %p91 = scmp.eq.s32.totalorder %s22, 0
      %p92 = por %p90, %p91
      %p93 = scmp.ne.s32.totalorder %s82, %s85
      %p94 = scmp.eq.s32.totalorder %s27, 5
      %p95 = por %p93, %p94
      %p96 = scmp.ne.s32.totalorder %s85, %s86
      %p97 = scmp.eq.s32.totalorder %s27, 0
      %p98 = por %p96, %p97
      %p99 = scmp.ne.s32.totalorder %s85, %s86
      %p100 = scmp.eq.s32.totalorder %s28, 5
      %p101 = por %p99, %p100
      %p103 = scmp.ne.s32.totalorder %s86, %s102
      %p104 = scmp.eq.s32.totalorder %s28, 0
      %p105 = por %p103, %p104
      %s106 = sadd.s32 %s30, 1
      %s107 = smul.u32 %s106, 2
      %p108 = scmp.lt.s32.totalorder %s107, 5
      %s109 = scalar_select %p108, %s107, 5
      %s110 = sadd.s32 %s37, 1
      %s111 = smul.u32 %s110, 2
      %p112 = scmp.lt.s32.totalorder %s111, 5
      %s113 = scalar_select %p112, %s111, 5
      %s114 = ssub.s32 %s29, %s41
      %s115 = ssub.s32 %s109, %s113
      %s116 = sor.u32 %s114, %s115
      %p117 = scmp.eq.s32.totalorder %s116, 0
      %s119 = sadd.s32 %s118, 1
      %s120 = scalar_select %p117, %s118, %s119
      %p123 = pneg %p117
      %p124 = scmp.eq.s32.totalorder %s22, 5
      %p125 = por %p123, %p124
      %p126 = scmp.ne.s32.totalorder %s118, %s121
      %p127 = scmp.eq.s32.totalorder %s22, 0
      %p128 = por %p126, %p127
      %p129 = scmp.ne.s32.totalorder %s118, %s121
      %p130 = scmp.eq.s32.totalorder %s27, 5
      %p131 = por %p129, %p130
      %p132 = scmp.ne.s32.totalorder %s121, %s122
      %p133 = scmp.eq.s32.totalorder %s27, 0
      %p134 = por %p132, %p133
      %p135 = scmp.ne.s32.totalorder %s121, %s122
      %p136 = scmp.eq.s32.totalorder %s28, 5
      %p137 = por %p135, %p136
      %p139 = scmp.ne.s32.totalorder %s122, %s138
      %p140 = scmp.eq.s32.totalorder %s28, 0
      %p141 = por %p139, %p140
      %s143 = sadd.s32 %s142, 1
      %p146 = scmp.eq.s32.totalorder %s22, 5
      %p147 = scmp.ne.s32.totalorder %s142, %s144
      %p148 = scmp.eq.s32.totalorder %s22, 0
      %p149 = por %p147, %p148
      %p150 = scmp.ne.s32.totalorder %s142, %s144
      %p151 = scmp.eq.s32.totalorder %s27, 5
      %p152 = por %p150, %p151
      %p153 = scmp.ne.s32.totalorder %s144, %s145
      %p154 = scmp.eq.s32.totalorder %s27, 0
      %p155 = por %p153, %p154
      %p156 = scmp.ne.s32.totalorder %s144, %s145
      %p157 = scmp.eq.s32.totalorder %s28, 5
      %p158 = por %p156, %p157
      %p160 = scmp.ne.s32.totalorder %s145, %s159
      %p161 = scmp.eq.s32.totalorder %s28, 0
      %p162 = por %p160, %p161
      %s164 = sadd.s32 %s163, 1
      %p167 = scmp.eq.s32.totalorder %s22, 5
      %p168 = scmp.ne.s32.totalorder %s163, %s165
      %p169 = scmp.eq.s32.totalorder %s22, 0
      %p170 = por %p168, %p169
      %p171 = scmp.ne.s32.totalorder %s163, %s165
      %p172 = scmp.eq.s32.totalorder %s27, 5
      %p173 = por %p171, %p172
      %p174 = scmp.ne.s32.totalorder %s165, %s166
      %p175 = scmp.eq.s32.totalorder %s27, 0
      %p176 = por %p174, %p175
      %p177 = scmp.ne.s32.totalorder %s165, %s166
      %p178 = scmp.eq.s32.totalorder %s28, 5
      %p179 = por %p177, %p178
      %p181 = scmp.ne.s32.totalorder %s166, %s180
      %p182 = scmp.eq.s32.totalorder %s28, 0
      %p183 = por %p181, %p182
      %s185 = sadd.s32 %s184, 1
      %p188 = scmp.eq.s32.totalorder %s22, 5
      %p189 = scmp.ne.s32.totalorder %s184, %s186
      %p190 = scmp.eq.s32.totalorder %s22, 0
      %p191 = por %p189, %p190
      %p192 = scmp.ne.s32.totalorder %s184, %s186
      %p193 = scmp.eq.s32.totalorder %s27, 5
      %p194 = por %p192, %p193
      %p195 = scmp.ne.s32.totalorder %s186, %s187
      %p196 = scmp.eq.s32.totalorder %s27, 0
      %p197 = por %p195, %p196
      %p198 = scmp.ne.s32.totalorder %s186, %s187
      %p199 = scmp.eq.s32.totalorder %s28, 5
      %p200 = por %p198, %p199
      %p202 = scmp.ne.s32.totalorder %s187, %s201
      %p203 = scmp.eq.s32.totalorder %s28, 0
      %p204 = por %p202, %p203
      %s205 = ssub.s32 %s29, %s41
      %s206 = ssub.s32 %s30, %s37
      %s207 = sor.u32 %s205, %s206
      %p208 = scmp.eq.s32.totalorder %s207, 0
      %s210 = sadd.s32 %s209, 1
      %s211 = scalar_select %p208, %s209, %s210
      %p214 = pneg %p208
      %p215 = scmp.eq.s32.totalorder %s22, 5
      %p216 = por %p214, %p215
      %p217 = scmp.ne.s32.totalorder %s209, %s212
      %p218 = scmp.eq.s32.totalorder %s22, 0
      %p219 = por %p217, %p218
      %p220 = scmp.ne.s32.totalorder %s209, %s212
      %p221 = scmp.eq.s32.totalorder %s27, 5
      %p222 = por %p220, %p221
      %p223 = scmp.ne.s32.totalorder %s212, %s213
      %p224 = scmp.eq.s32.totalorder %s27, 0
      %p225 = por %p223, %p224
      %p226 = scmp.ne.s32.totalorder %s212, %s213
      %p227 = scmp.eq.s32.totalorder %s28, 5
      %p228 = por %p226, %p227
      %p230 = scmp.ne.s32.totalorder %s213, %s229
      %p231 = scmp.eq.s32.totalorder %s28, 0
      %p232 = por %p230, %p231
      %p233 = scmp.le.s32.totalorder 1, %s22
      %p234 = scmp.lt.s32.totalorder %s22, 7
      %p235 = pnand %p233, %p234
      %p236 = pneg %p235
      // Predicated region
      $region9: #{tpu_custom_call.1} parent=5 // pred_check
        _
      $region10: #{tpu_custom_call.1} parent=5 // pred_check_branch
        %238 = sbr.rel (%p235) target = $region12
      $region11: #{tpu_custom_call.1} parent=5 // pred_region
        %s239 = ssub.s32 %s22, 1
        // Predicated region
        $region13: #{tpu_custom_call.1} parent=11 // pred_check
          %p240 = pneg %p155
        $region14: #{tpu_custom_call.1} parent=11 // pred_check_branch
          %242 = sbr.rel (%p240) target = $region16
        $region15: #{tpu_custom_call.1} parent=11 // pred_region
          %s244 = ssub.s32 10240, 10240
          %245 = vsyncadd [#allocation10], %s244
          %s246 = sshll.u32 [#allocation9], 4
          %s247 = int_to_ptr.vmem [resolvable:$true] %s246
          %252 = dma.hbm_to_vmem [thread:$0]  %s3, 10240, %s247, [#allocation10], 128, 128, 8
        $region16: #{tpu_custom_call.1} parent=11 // pred_fallthru
          _
        // Predicated region
        $region17: #{tpu_custom_call.1} parent=11 // pred_check
          %p253 = pneg %p176
        $region18: #{tpu_custom_call.1} parent=11 // pred_check_branch
          %255 = sbr.rel (%p253) target = $region20
        $region19: #{tpu_custom_call.1} parent=11 // pred_region
          _
        $region20: #{tpu_custom_call.1} parent=11 // pred_fallthru
          _
        // Predicated region
        $region21: #{tpu_custom_call.1} parent=11 // pred_check
          %p256 = pneg %p197
        $region22: #{tpu_custom_call.1} parent=11 // pred_check_branch
          %258 = sbr.rel (%p256) target = $region24
        $region23: #{tpu_custom_call.1} parent=11 // pred_region
          _
        $region24: #{tpu_custom_call.1} parent=11 // pred_fallthru
          _
      $region12: #{tpu_custom_call.1} parent=5 // pred_fallthru
        _
      %p259 = scmp.lt.s32.totalorder %s22, 6
      // Predicated region
      $region25: #{tpu_custom_call.1} parent=5 // pred_check
        %p260 = pneg %p259
      $region26: #{tpu_custom_call.1} parent=5 // pred_check_branch
        %262 = sbr.rel (%p260) target = $region28
      $region27: #{tpu_custom_call.1} parent=5 // pred_region
        // Predicated region
        $region29: #{tpu_custom_call.1} parent=27 // pred_check
          %p263 = pneg %p64
        $region30: #{tpu_custom_call.1} parent=27 // pred_check_branch
          %265 = sbr.rel (%p263) target = $region32
        $region31: #{tpu_custom_call.1} parent=27 // pred_region
          %s266 = sand.u32 %s54, 1
          %s267 = scalar_lea.sflag [#allocation4], %s266
          %s268 = sand.u32 %s54, 1
          %s269 = smul.addr %s268, 4
          %s270 = scalar_lea.vmem [#allocation3], %s269
          %s271 = smul.u32 %s30, 2
          %s272 = ssub.s32 %s271, 1
          %p273 = scmp.gt.s32.totalorder %s272, 0
          %s274 = scalar_select %p273, %s272, 0
          %s276 = ssub.s32 64, 64
          %277 = vsyncadd %s267, %s276
          %s278 = smul.addr %s29, 6
          %s279 = sadd.s32 %s274, %s278
          %s280 = smul.addr %s279, 64
          %s281 = scalar_lea.hbm %s0, %s280
          %s283 = sshll.u32 %s270, 4
          %s284 = int_to_ptr.vmem [resolvable:$true] %s283
          %286 = dma.hbm_to_vmem [thread:$0]  %s281, 64, %s284, %s267
        $region32: #{tpu_custom_call.1} parent=27 // pred_fallthru
          _
        // Predicated region
        $region33: #{tpu_custom_call.1} parent=27 // pred_check
          %p287 = pneg %p92
        $region34: #{tpu_custom_call.1} parent=27 // pred_check_branch
          %289 = sbr.rel (%p287) target = $region36
        $region35: #{tpu_custom_call.1} parent=27 // pred_region
          %s290 = sand.u32 %s22, 1
          %s291 = scalar_lea.sflag [#allocation7], %s290
          %s292 = sand.u32 %s82, 1
          %s293 = smul.addr %s292, 8
          %s294 = scalar_lea.vmem [#allocation6], %s293
          %s295 = smul.u32 2, %s30
          %s297 = ssub.s32 128, 128
          %298 = vsyncadd %s291, %s297
          %s299 = smul.addr %s29, 6
          %s300 = sadd.s32 %s295, %s299
          %s301 = smul.addr %s300, 64
          %s302 = scalar_lea.hbm %s1, %s301
          %s303 = sshll.u32 %s294, 4
          %s304 = int_to_ptr.vmem [resolvable:$true] %s303
          %309 = dma.hbm_to_vmem [thread:$0]  %s302, 128, %s304, %s291, 64, 64, 4
        $region36: #{tpu_custom_call.1} parent=27 // pred_fallthru
          _
        // Predicated region
        $region37: #{tpu_custom_call.1} parent=27 // pred_check
          %p310 = pneg %p128
        $region38: #{tpu_custom_call.1} parent=27 // pred_check_branch
          %312 = sbr.rel (%p310) target = $region40
        $region39: #{tpu_custom_call.1} parent=27 // pred_region
          %s313 = sand.u32 %s22, 1
          %s314 = scalar_lea.sflag [#allocation7], %s313
          %s315 = sand.u32 %s118, 1
          %s316 = smul.addr %s315, 4
          %s317 = scalar_lea.vmem [#allocation8], %s316
          %s318 = sadd.s32 %s30, 1
          %s319 = smul.u32 %s318, 2
          %p320 = scmp.lt.s32.totalorder %s319, 5
          %s321 = scalar_select %p320, %s319, 5
          %s323 = ssub.s32 64, 64
          %324 = vsyncadd %s314, %s323
          %s325 = smul.addr %s29, 6
          %s326 = sadd.s32 %s321, %s325
          %s327 = smul.addr %s326, 64
          %s328 = scalar_lea.hbm %s2, %s327
          %s330 = sshll.u32 %s317, 4
          %s331 = int_to_ptr.vmem [resolvable:$true] %s330
          %333 = dma.hbm_to_vmem [thread:$0]  %s328, 64, %s331, %s314
        $region40: #{tpu_custom_call.1} parent=27 // pred_fallthru
          _
      $region28: #{tpu_custom_call.1} parent=5 // pred_fallthru
        _
      %p334 = scmp.le.s32.totalorder 1, %s22
      %p335 = scmp.lt.s32.totalorder %s22, 7
      %p336 = pnand %p334, %p335
      %p337 = pneg %p336
      // Predicated region
      $region41: #{tpu_custom_call.1} parent=5 // pred_check
        _
      $region42: #{tpu_custom_call.1} parent=5 // pred_check_branch
        %339 = sbr.rel (%p336) target = $region44
      $region43: #{tpu_custom_call.1} parent=5 // pred_region
        %s340 = ssub.s32 %s22, 1
        %s341 = sand.u32 %s57, 1
        %s342 = scalar_lea.sflag [#allocation4], %s341
        %s343 = sand.u32 %s57, 1
        %s344 = smul.addr %s343, 4
        %s345 = scalar_lea.vmem [#allocation3], %s344
        // Predicated region
        $region45: #{tpu_custom_call.1} parent=43 // pred_check
          %p346 = pneg %p70
        $region46: #{tpu_custom_call.1} parent=43 // pred_check_branch
          %348 = sbr.rel (%p346) target = $region48
        $region47: #{tpu_custom_call.1} parent=43 // pred_region
          %349 = dma.done %s342, 64
        $region48: #{tpu_custom_call.1} parent=43 // pred_fallthru
          _
        %s350 = sand.u32 %s27, 1
        %s351 = scalar_lea.sflag [#allocation7], %s350
        %s352 = sand.u32 %s85, 1
        %s353 = smul.addr %s352, 8
        %s354 = scalar_lea.vmem [#allocation6], %s353
        // Predicated region
        $region49: #{tpu_custom_call.1} parent=43 // pred_check
          %p355 = pneg %p98
        $region50: #{tpu_custom_call.1} parent=43 // pred_check_branch
          %357 = sbr.rel (%p355) target = $region52
        $region51: #{tpu_custom_call.1} parent=43 // pred_region
          %358 = dma.done %s351, 128
        $region52: #{tpu_custom_call.1} parent=43 // pred_fallthru
          _
        %s359 = sand.u32 %s27, 1
        %s360 = scalar_lea.sflag [#allocation7], %s359
        %s361 = sand.u32 %s121, 1
        %s362 = smul.addr %s361, 4
        %s363 = scalar_lea.vmem [#allocation8], %s362
        // Predicated region
        $region53: #{tpu_custom_call.1} parent=43 // pred_check
          %p364 = pneg %p134
        $region54: #{tpu_custom_call.1} parent=43 // pred_check_branch
          %366 = sbr.rel (%p364) target = $region56
        $region55: #{tpu_custom_call.1} parent=43 // pred_region
          %367 = dma.done %s360, 64
        $region56: #{tpu_custom_call.1} parent=43 // pred_fallthru
          _
        // Predicated region
        $region57: #{tpu_custom_call.1} parent=43 // pred_check
          %p368 = pneg %p155
        $region58: #{tpu_custom_call.1} parent=43 // pred_check_branch
          %370 = sbr.rel (%p368) target = $region60
        $region59: #{tpu_custom_call.1} parent=43 // pred_region
          %371 = dma.done [#allocation10], 10240
        $region60: #{tpu_custom_call.1} parent=43 // pred_fallthru
          _
        %s372 = sand.u32 %s57, 1
        %s373 = scalar_lea.sflag [#allocation4], %s372
        %s374 = sand.u32 %s57, 1
        %s375 = smul.addr %s374, 4
        %s376 = scalar_lea.vmem [#allocation3], %s375
        %p377 = pneg %p70
        %p378 = pneg %p67
        %s379 = sand.u32 %s27, 1
        %s380 = scalar_lea.sflag [#allocation7], %s379
        %s381 = sand.u32 %s85, 1
        %s382 = smul.addr %s381, 8
        %s383 = scalar_lea.vmem [#allocation6], %s382
        %p384 = pneg %p98
        %p385 = pneg %p95
        %s386 = sand.u32 %s27, 1
        %s387 = scalar_lea.sflag [#allocation7], %s386
        %s388 = sand.u32 %s121, 1
        %s389 = smul.addr %s388, 4
        %s390 = scalar_lea.vmem [#allocation8], %s389
        %p391 = pneg %p134
        %p392 = pneg %p131
        %p393 = pneg %p155
        %p394 = pneg %p152
        %p395 = pneg %p176
        %p396 = pneg %p173
        %p397 = pneg %p197
        %p398 = pneg %p194
        %p399 = pneg %p225
        %p400 = pneg %p222
        %s401 = sand.u32 %s212, 1
        %s402 = scalar_lea.sflag [#allocation5], %s401
        %s403 = sand.u32 %s212, 1
        %s404 = smul.addr %s403, 16
        %s405 = scalar_lea.vmem [#allocation11], %s404
        %s406 = smul.u32 %s32, 2
        %s407 = ssub.s32 %s406, 1
        %p408 = scmp.gt.s32.totalorder %s407, 0
        %s409 = scalar_select %p408, %s407, 0
        %s410 = smul.u32 2, %s32
        %s411 = sadd.s32 %s32, 1
        %s412 = smul.u32 %s411, 2
        %p413 = scmp.lt.s32.totalorder %s412, 5
        %s414 = scalar_select %p413, %s412, 5
        %s415 = smul.u32 2, %s32
        %v417 = vlaneseq
        %v418 = vshrl.u32 %v417, 7
        %v419 = vld [vmem:[%s345] sm:$0xf]
        %s420 = smul.u32 %s32, 16
        %s421 = ssub.s32 %s420, 8
        %v422 = vstv %s421
        %v423 = vadd.s32 %v418, %v422
        %vm424 = vcmp.ge.s32.totalorder %v423, 0
        %v425 = vsel %vm424, 1, 0
        %vm426 = vcmp.eq.s32.totalorder %v425, 1
        %vm427 = vmpackc.low %vm426, %vm426
        %v428 = vsel %vm427, %v419, 0
        %v429 = vld [vmem:[%s363] sm:$0xf]
        %s430 = sadd.s32 %s32, 1
        %s431 = smul.u32 %s430, 16
        %v432 = vstv %s431
        %v433 = vadd.s32 %v418, %v432
        %vm434 = vcmp.lt.s32.totalorder %v433, 40
        %v435 = vsel %vm434, 1, 0
        %vm436 = vcmp.eq.s32.totalorder %v435, 1
        %vm437 = vmpackc.low %vm436, %vm436
        %v438 = vsel %vm437, %v429, 0
        %439 = vst [vmem:[#allocation2] sm:$0xf] %v428
        %v440 = vld [vmem:[%s354] sm:$0xf]
        %v441 = vld [vmem:[%s354 + $0x4] sm:$0xf]
        %v444 = vunpack.c.l.b16 %v440
        %v445 = vunpack.c.l.b16 %v441
        %v446 = vpack.c.b16 %v444, %v444
        %v447 = vpack.c.b16 %v445, %v445
        %450 = vst [vmem:[#allocation2] sm:$0xf0] %v446
        %451 = vst [vmem:[#allocation2 + $0x8] sm:$0xf] %v447
        %v453 = vunpack.c.l.b16 %v438
        %v454 = vpack.c.b16 %v453, %v453
        %456 = vst [vmem:[#allocation2 + $0x8] sm:$0xf0] %v454
        %v457 = vld [vmem:[#allocation2] sm:$0xf8]
        %v458 = vld [vmem:[#allocation2 + $0x8] sm:$0x7]
        %v459 = vld [vmem:[#allocation2 + $0x8] sm:$0xf]
        %v460 = vld [vmem:[#allocation2] sm:$0xf0]
        %v461 = vld [vmem:[#allocation2 + $0x8] sm:$0x1f]
        %v462 = vld [vmem:[#allocation2] sm:$0xe0]
        %vm463 = vsmask.f32 7424
        %v465 = vshrl.u32 %v457, 16
        %v467 = vshll.u32 %v457, 16
        %v469 = vrot.slane %v467, 1
        %v470 = vor.u32 %v465, %v469
        %v472 = vshll.u32 %v459, 16
        %v474 = vrot.slane %v472, 1
        %v475 = vsel %vm463, %v470, %v474
        %v476 = vshrl.u32 %v459, 16
        %v478 = vor.u32 %v476, %v474
        %vm481 = vcmask 1046528
        %v482 = vrot.slane %v460, 1
        %v483 = vrot.slane %v459, 1
        %v484 = vsel %vm481, %v482, %v483
        %vm485 = vsmask.f32 6400
        %v487 = vshrl.u32 %v460, 16
        %v489 = vrot.slane %v487, 1
        %v490 = vshll.u32 %v460, 16
        %v492 = vrot.slane %v490, 2
        %v493 = vor.u32 %v489, %v492
        %v495 = vshrl.u32 %v461, 16
        %v497 = vrot.slane %v495, 1
        %v498 = vshll.u32 %v461, 16
        %v500 = vrot.slane %v498, 2
        %v501 = vor.u32 %v497, %v500
        %v502 = vsel %vm485, %v493, %v501
        %vm505 = vcmask 1045504
        %v506 = vrot.slane %v462, 2
        %v507 = vrot.slane %v461, 2
        %v508 = vsel %vm505, %v506, %v507
        %v509 = vld [vmem:[#allocation9] sm:$0xff]
        %v510 = vld [vmem:[#allocation9 + $0x8] sm:$0xff]
        %v511 = vld [vmem:[#allocation9 + $0x10] sm:$0xff]
        %v512 = vld [vmem:[#allocation9 + $0x18] sm:$0xff]
        %v513 = vld [vmem:[#allocation9 + $0x20] sm:$0xff]
        %v514 = vld [vmem:[#allocation9 + $0x28] sm:$0xff]
        %v515 = vld [vmem:[#allocation9 + $0x30] sm:$0xff]
        %v516 = vld [vmem:[#allocation9 + $0x38] sm:$0xff]
        %v517 = vld [vmem:[#allocation9 + $0x40] sm:$0xff]
        %v518 = vld [vmem:[#allocation9 + $0x48] sm:$0xff]
        %v519 = vld [vmem:[#allocation9 + $0x50] sm:$0xff]
        %v520 = vld [vmem:[#allocation9 + $0x58] sm:$0xff]
        %v521 = vld [vmem:[#allocation9 + $0x60] sm:$0xff]
        %v522 = vld [vmem:[#allocation9 + $0x68] sm:$0xff]
        %v523 = vld [vmem:[#allocation9 + $0x70] sm:$0xff]
        %v524 = vld [vmem:[#allocation9 + $0x78] sm:$0xff]
        %v525 = vld [vmem:[#allocation9 + $0x80] sm:$0xff]
        %v526 = vld [vmem:[#allocation9 + $0x88] sm:$0xff]
        %v527 = vld [vmem:[#allocation9 + $0x90] sm:$0xff]
        %v528 = vld [vmem:[#allocation9 + $0x98] sm:$0xff]
        %v529 = vld [vmem:[#allocation9 + $0xa0] sm:$0xff]
        %v530 = vld [vmem:[#allocation9 + $0xa8] sm:$0xff]
        %v531 = vld [vmem:[#allocation9 + $0xb0] sm:$0xff]
        %v532 = vld [vmem:[#allocation9 + $0xb8] sm:$0xff]
        %v533 = vld [vmem:[#allocation9 + $0xc0] sm:$0xff]
        %v534 = vld [vmem:[#allocation9 + $0xc8] sm:$0xff]
        %v535 = vld [vmem:[#allocation9 + $0xd0] sm:$0xff]
        %v536 = vld [vmem:[#allocation9 + $0xd8] sm:$0xff]
        %v537 = vld [vmem:[#allocation9 + $0xe0] sm:$0xff]
        %v538 = vld [vmem:[#allocation9 + $0xe8] sm:$0xff]
        %v539 = vld [vmem:[#allocation9 + $0xf0] sm:$0xff]
        %v540 = vld [vmem:[#allocation9 + $0xf8] sm:$0xff]
        %v541 = vld [vmem:[#allocation9 + $0x100] sm:$0xff]
        %v542 = vld [vmem:[#allocation9 + $0x108] sm:$0xff]
        %v543 = vld [vmem:[#allocation9 + $0x110] sm:$0xff]
        %v544 = vld [vmem:[#allocation9 + $0x118] sm:$0xff]
        %v545 = vld [vmem:[#allocation9 + $0x120] sm:$0xff]
        %v546 = vld [vmem:[#allocation9 + $0x128] sm:$0xff]
        %v547 = vld [vmem:[#allocation9 + $0x130] sm:$0xff]
        %v548 = vld [vmem:[#allocation9 + $0x138] sm:$0xff]
        %v549 = vld [vmem:[#allocation9 + $0x140] sm:$0xff]
        %v550 = vld [vmem:[#allocation9 + $0x148] sm:$0xff]
        %v551 = vld [vmem:[#allocation9 + $0x150] sm:$0xff]
        %v552 = vld [vmem:[#allocation9 + $0x158] sm:$0xff]
        %v553 = vld [vmem:[#allocation9 + $0x160] sm:$0xff]
        %v554 = vld [vmem:[#allocation9 + $0x168] sm:$0xff]
        %v555 = vld [vmem:[#allocation9 + $0x170] sm:$0xff]
        %v556 = vld [vmem:[#allocation9 + $0x178] sm:$0xff]
        %v557 = vld [vmem:[#allocation9 + $0x180] sm:$0xff]
        %v558 = vld [vmem:[#allocation9 + $0x188] sm:$0xff]
        %v559 = vld [vmem:[#allocation9 + $0x190] sm:$0xff]
        %v560 = vld [vmem:[#allocation9 + $0x198] sm:$0xff]
        %v561 = vld [vmem:[#allocation9 + $0x1a0] sm:$0xff]
        %v562 = vld [vmem:[#allocation9 + $0x1a8] sm:$0xff]
        %v563 = vld [vmem:[#allocation9 + $0x1b0] sm:$0xff]
        %v564 = vld [vmem:[#allocation9 + $0x1b8] sm:$0xff]
        %v565 = vld [vmem:[#allocation9 + $0x1c0] sm:$0xff]
        %v566 = vld [vmem:[#allocation9 + $0x1c8] sm:$0xff]
        %v567 = vld [vmem:[#allocation9 + $0x1d0] sm:$0xff]
        %v568 = vld [vmem:[#allocation9 + $0x1d8] sm:$0xff]
        %v569 = vld [vmem:[#allocation9 + $0x1e0] sm:$0xff]
        %v570 = vld [vmem:[#allocation9 + $0x1e8] sm:$0xff]
        %v571 = vld [vmem:[#allocation9 + $0x1f0] sm:$0xff]
        %v572 = vld [vmem:[#allocation9 + $0x1f8] sm:$0xff]
        %v573 = vld [vmem:[#allocation9 + $0x200] sm:$0xff]
        %v574 = vld [vmem:[#allocation9 + $0x208] sm:$0xff]
        %v575 = vld [vmem:[#allocation9 + $0x210] sm:$0xff]
        %v576 = vld [vmem:[#allocation9 + $0x218] sm:$0xff]
        %v577 = vld [vmem:[#allocation9 + $0x220] sm:$0xff]
        %v578 = vld [vmem:[#allocation9 + $0x228] sm:$0xff]
        %v579 = vld [vmem:[#allocation9 + $0x230] sm:$0xff]
        %v580 = vld [vmem:[#allocation9 + $0x238] sm:$0xff]
        %v581 = vld [vmem:[#allocation9 + $0x240] sm:$0xff]
        %v582 = vld [vmem:[#allocation9 + $0x248] sm:$0xff]
        %v583 = vld [vmem:[#allocation9 + $0x250] sm:$0xff]
        %v584 = vld [vmem:[#allocation9 + $0x258] sm:$0xff]
        %v585 = vld [vmem:[#allocation9 + $0x260] sm:$0xff]
        %v586 = vld [vmem:[#allocation9 + $0x268] sm:$0xff]
        %v587 = vld [vmem:[#allocation9 + $0x270] sm:$0xff]
        %v588 = vld [vmem:[#allocation9 + $0x278] sm:$0xff]
        %vm591 = vcmask 1044480
        %v592 = vrot.slane %v457, 3
        %v593 = vrot.slane %v458, 3
        %v594 = vsel %vm591, %v592, %v593
        %v595 = vrot.slane %v475, 3
        %v596 = vrot.slane %v478, 3
        %v597 = vsel %vm591, %v595, %v596
        %v598 = vrot.slane %v484, 3
        %v599 = vrot.slane %v483, 3
        %v600 = vsel %vm591, %v598, %v599
        %v601 = vrot.slane %v502, 3
        %v602 = vrot.slane %v501, 3
        %v603 = vsel %vm591, %v601, %v602
        %v604 = vrot.slane %v508, 3
        %v605 = vrot.slane %v507, 3
        %v606 = vsel %vm591, %v604, %v605
        %v692 = vunpack.c.l.b16 %v509
        %v693 = vunpack.c.h.b16 %v509
        %v694 = vunpack.c.l.b16 %v510
        %v695 = vunpack.c.h.b16 %v510
        %v696 = vunpack.c.l.b16 %v511
        %v697 = vunpack.c.h.b16 %v511
        %v698 = vunpack.c.l.b16 %v512
        %v699 = vunpack.c.h.b16 %v512
        %v700 = vunpack.c.l.b16 %v513
        %v701 = vunpack.c.h.b16 %v513
        %v702 = vunpack.c.l.b16 %v514
        %v703 = vunpack.c.h.b16 %v514
        %v704 = vunpack.c.l.b16 %v515
        %v705 = vunpack.c.h.b16 %v515
        %v706 = vunpack.c.l.b16 %v516
        %v707 = vunpack.c.h.b16 %v516
        %v708 = vunpack.c.l.b16 %v517
        %v709 = vunpack.c.h.b16 %v517
        %v710 = vunpack.c.l.b16 %v518
        %v711 = vunpack.c.h.b16 %v518
        %v712 = vunpack.c.l.b16 %v519
        %v713 = vunpack.c.h.b16 %v519
        %v714 = vunpack.c.l.b16 %v520
        %v715 = vunpack.c.h.b16 %v520
        %v716 = vunpack.c.l.b16 %v521
        %v717 = vunpack.c.h.b16 %v521
        %v718 = vunpack.c.l.b16 %v522
        %v719 = vunpack.c.h.b16 %v522
        %v720 = vunpack.c.l.b16 %v523
        %v721 = vunpack.c.h.b16 %v523
        %v722 = vunpack.c.l.b16 %v524
        %v723 = vunpack.c.h.b16 %v524
        %v724 = vunpack.c.l.b16 %v525
        %v725 = vunpack.c.h.b16 %v525
        %v726 = vunpack.c.l.b16 %v526
        %v727 = vunpack.c.h.b16 %v526
        %v728 = vunpack.c.l.b16 %v527
        %v729 = vunpack.c.h.b16 %v527
        %v730 = vunpack.c.l.b16 %v528
        %v731 = vunpack.c.h.b16 %v528
        %v732 = vunpack.c.l.b16 %v529
        %v733 = vunpack.c.h.b16 %v529
        %v734 = vunpack.c.l.b16 %v530
        %v735 = vunpack.c.h.b16 %v530
        %v736 = vunpack.c.l.b16 %v531
        %v737 = vunpack.c.h.b16 %v531
        %v738 = vunpack.c.l.b16 %v532
        %v739 = vunpack.c.h.b16 %v532
        %v740 = vunpack.c.l.b16 %v533
        %v741 = vunpack.c.h.b16 %v533
        %v742 = vunpack.c.l.b16 %v534
        %v743 = vunpack.c.h.b16 %v534
        %v744 = vunpack.c.l.b16 %v535
        %v745 = vunpack.c.h.b16 %v535
        %v746 = vunpack.c.l.b16 %v536
        %v747 = vunpack.c.h.b16 %v536
        %v748 = vunpack.c.l.b16 %v537
        %v749 = vunpack.c.h.b16 %v537
        %v750 = vunpack.c.l.b16 %v538
        %v751 = vunpack.c.h.b16 %v538
        %v752 = vunpack.c.l.b16 %v539
        %v753 = vunpack.c.h.b16 %v539
        %v754 = vunpack.c.l.b16 %v540
        %v755 = vunpack.c.h.b16 %v540
        %v756 = vunpack.c.l.b16 %v541
        %v757 = vunpack.c.h.b16 %v541
        %v758 = vunpack.c.l.b16 %v542
        %v759 = vunpack.c.h.b16 %v542
        %v760 = vunpack.c.l.b16 %v543
        %v761 = vunpack.c.h.b16 %v543
        %v762 = vunpack.c.l.b16 %v544
        %v763 = vunpack.c.h.b16 %v544
        %v764 = vunpack.c.l.b16 %v545
        %v765 = vunpack.c.h.b16 %v545
        %v766 = vunpack.c.l.b16 %v546
        %v767 = vunpack.c.h.b16 %v546
        %v768 = vunpack.c.l.b16 %v547
        %v769 = vunpack.c.h.b16 %v547
        %v770 = vunpack.c.l.b16 %v548
        %v771 = vunpack.c.h.b16 %v548
        %v772 = vunpack.c.l.b16 %v549
        %v773 = vunpack.c.h.b16 %v549
        %v774 = vunpack.c.l.b16 %v550
        %v775 = vunpack.c.h.b16 %v550
        %v776 = vunpack.c.l.b16 %v551
        %v777 = vunpack.c.h.b16 %v551
        %v778 = vunpack.c.l.b16 %v552
        %v779 = vunpack.c.h.b16 %v552
        %v780 = vunpack.c.l.b16 %v553
        %v781 = vunpack.c.h.b16 %v553
        %v782 = vunpack.c.l.b16 %v554
        %v783 = vunpack.c.h.b16 %v554
        %v784 = vunpack.c.l.b16 %v555
        %v785 = vunpack.c.h.b16 %v555
        %v786 = vunpack.c.l.b16 %v556
        %v787 = vunpack.c.h.b16 %v556
        %v788 = vunpack.c.l.b16 %v557
        %v789 = vunpack.c.h.b16 %v557
        %v790 = vunpack.c.l.b16 %v558
        %v791 = vunpack.c.h.b16 %v558
        %v792 = vunpack.c.l.b16 %v559
        %v793 = vunpack.c.h.b16 %v559
        %v794 = vunpack.c.l.b16 %v560
        %v795 = vunpack.c.h.b16 %v560
        %v796 = vunpack.c.l.b16 %v561
        %v797 = vunpack.c.h.b16 %v561
        %v798 = vunpack.c.l.b16 %v562
        %v799 = vunpack.c.h.b16 %v562
        %v800 = vunpack.c.l.b16 %v563
        %v801 = vunpack.c.h.b16 %v563
        %v802 = vunpack.c.l.b16 %v564
        %v803 = vunpack.c.h.b16 %v564
        %v804 = vunpack.c.l.b16 %v565
        %v805 = vunpack.c.h.b16 %v565
        %v806 = vunpack.c.l.b16 %v566
        %v807 = vunpack.c.h.b16 %v566
        %v808 = vunpack.c.l.b16 %v567
        %v809 = vunpack.c.h.b16 %v567
        %v810 = vunpack.c.l.b16 %v568
        %v811 = vunpack.c.h.b16 %v568
        %v812 = vunpack.c.l.b16 %v569
        %v813 = vunpack.c.h.b16 %v569
        %v814 = vunpack.c.l.b16 %v570
        %v815 = vunpack.c.h.b16 %v570
        %v816 = vunpack.c.l.b16 %v571
        %v817 = vunpack.c.h.b16 %v571
        %v818 = vunpack.c.l.b16 %v572
        %v819 = vunpack.c.h.b16 %v572
        %v820 = vunpack.c.l.b16 %v573
        %v821 = vunpack.c.h.b16 %v573
        %v822 = vunpack.c.l.b16 %v574
        %v823 = vunpack.c.h.b16 %v574
        %v824 = vunpack.c.l.b16 %v575
        %v825 = vunpack.c.h.b16 %v575
        %v826 = vunpack.c.l.b16 %v576
        %v827 = vunpack.c.h.b16 %v576
        %v828 = vunpack.c.l.b16 %v577
        %v829 = vunpack.c.h.b16 %v577
        %v830 = vunpack.c.l.b16 %v578
        %v831 = vunpack.c.h.b16 %v578
        %v832 = vunpack.c.l.b16 %v579
        %v833 = vunpack.c.h.b16 %v579
        %v834 = vunpack.c.l.b16 %v580
        %v835 = vunpack.c.h.b16 %v580
        %v836 = vunpack.c.l.b16 %v581
        %v837 = vunpack.c.h.b16 %v581
        %v838 = vunpack.c.l.b16 %v582
        %v839 = vunpack.c.h.b16 %v582
        %v840 = vunpack.c.l.b16 %v583
        %v841 = vunpack.c.h.b16 %v583
        %v842 = vunpack.c.l.b16 %v584
        %v843 = vunpack.c.h.b16 %v584
        %v844 = vunpack.c.l.b16 %v585
        %v845 = vunpack.c.h.b16 %v585
        %v846 = vunpack.c.l.b16 %v586
        %v847 = vunpack.c.h.b16 %v586
        %v848 = vunpack.c.l.b16 %v587
        %v849 = vunpack.c.h.b16 %v587
        %v850 = vunpack.c.l.b16 %v588
        %v851 = vunpack.c.h.b16 %v588
        %v852 = vpack.c.b16 %v694, %v692
        %v853 = vpack.c.b16 %v695, %v693
        %v854 = vpack.c.b16 %v698, %v696
        %v855 = vpack.c.b16 %v699, %v697
        %v856 = vpack.c.b16 %v702, %v700
        %v857 = vpack.c.b16 %v703, %v701
        %v858 = vpack.c.b16 %v706, %v704
        %v859 = vpack.c.b16 %v707, %v705
        %v860 = vpack.c.b16 %v710, %v708
        %v861 = vpack.c.b16 %v711, %v709
        %v862 = vpack.c.b16 %v714, %v712
        %v863 = vpack.c.b16 %v715, %v713
        %v864 = vpack.c.b16 %v718, %v716
        %v865 = vpack.c.b16 %v719, %v717
        %v866 = vpack.c.b16 %v722, %v720
        %v867 = vpack.c.b16 %v723, %v721
        %v868 = vpack.c.b16 %v726, %v724
        %v869 = vpack.c.b16 %v727, %v725
        %v870 = vpack.c.b16 %v730, %v728
        %v871 = vpack.c.b16 %v731, %v729
        %v872 = vpack.c.b16 %v734, %v732
        %v873 = vpack.c.b16 %v735, %v733
        %v874 = vpack.c.b16 %v738, %v736
        %v875 = vpack.c.b16 %v739, %v737
        %v876 = vpack.c.b16 %v742, %v740
        %v877 = vpack.c.b16 %v743, %v741
        %v878 = vpack.c.b16 %v746, %v744
        %v879 = vpack.c.b16 %v747, %v745
        %v880 = vpack.c.b16 %v750, %v748
        %v881 = vpack.c.b16 %v751, %v749
        %v882 = vpack.c.b16 %v754, %v752
        %v883 = vpack.c.b16 %v755, %v753
        %v884 = vpack.c.b16 %v758, %v756
        %v885 = vpack.c.b16 %v759, %v757
        %v886 = vpack.c.b16 %v762, %v760
        %v887 = vpack.c.b16 %v763, %v761
        %v888 = vpack.c.b16 %v766, %v764
        %v889 = vpack.c.b16 %v767, %v765
        %v890 = vpack.c.b16 %v770, %v768
        %v891 = vpack.c.b16 %v771, %v769
        %v892 = vpack.c.b16 %v774, %v772
        %v893 = vpack.c.b16 %v775, %v773
        %v894 = vpack.c.b16 %v778, %v776
        %v895 = vpack.c.b16 %v779, %v777
        %v896 = vpack.c.b16 %v782, %v780
        %v897 = vpack.c.b16 %v783, %v781
        %v898 = vpack.c.b16 %v786, %v784
        %v899 = vpack.c.b16 %v787, %v785
        %v900 = vpack.c.b16 %v790, %v788
        %v901 = vpack.c.b16 %v791, %v789
        %v902 = vpack.c.b16 %v794, %v792
        %v903 = vpack.c.b16 %v795, %v793
        %v904 = vpack.c.b16 %v798, %v796
        %v905 = vpack.c.b16 %v799, %v797
        %v906 = vpack.c.b16 %v802, %v800
        %v907 = vpack.c.b16 %v803, %v801
        %v908 = vpack.c.b16 %v806, %v804
        %v909 = vpack.c.b16 %v807, %v805
        %v910 = vpack.c.b16 %v810, %v808
        %v911 = vpack.c.b16 %v811, %v809
        %v912 = vpack.c.b16 %v814, %v812
        %v913 = vpack.c.b16 %v815, %v813
        %v914 = vpack.c.b16 %v818, %v816
        %v915 = vpack.c.b16 %v819, %v817
        %v916 = vpack.c.b16 %v822, %v820
        %v917 = vpack.c.b16 %v823, %v821
        %v918 = vpack.c.b16 %v826, %v824
        %v919 = vpack.c.b16 %v827, %v825
        %v920 = vpack.c.b16 %v830, %v828
        %v921 = vpack.c.b16 %v831, %v829
        %v922 = vpack.c.b16 %v834, %v832
        %v923 = vpack.c.b16 %v835, %v833
        %v924 = vpack.c.b16 %v838, %v836
        %v925 = vpack.c.b16 %v839, %v837
        %v926 = vpack.c.b16 %v842, %v840
        %v927 = vpack.c.b16 %v843, %v841
        %v928 = vpack.c.b16 %v846, %v844
        %v929 = vpack.c.b16 %v847, %v845
        %v930 = vpack.c.b16 %v850, %v848
        %v931 = vpack.c.b16 %v851, %v849
        %1012 = vmatprep.subr.bf16.mxu0 %v853
        %1013 = vmatpush1.bf16.msra.mxu0 %v852
        %1014 = vmatprep.subr.bf16.mxu0 %v855
        %1015 = vmatpush1.bf16.msra.mxu0 %v854
        %1016 = vmatprep.subr.bf16.mxu0 %v857
        %1017 = vmatpush1.bf16.msra.mxu0 %v856
        %1018 = vmatprep.subr.bf16.mxu0 %v859
        %1019 = vmatpush1.bf16.msra.mxu0 %v858
        %1020 = vmatprep.subr.bf16.mxu0 %v861
        %1021 = vmatpush1.bf16.msra.mxu0 %v860
        %1022 = vmatprep.subr.bf16.mxu0 %v863
        %1023 = vmatpush1.bf16.msra.mxu0 %v862
        %1024 = vmatprep.subr.bf16.mxu0 %v865
        %1025 = vmatpush1.bf16.msra.mxu0 %v864
        %1026 = vmatprep.subr.bf16.mxu0 %v867
        %1027 = vmatpush1.bf16.msra.mxu0 %v866
        %1028 = vmatprep.subr.bf16.mxu0 %v869
        %1029 = vmatpush1.bf16.msra.mxu0 %v868
        %1030 = vmatprep.subr.bf16.mxu0 %v871
        %1031 = vmatpush1.bf16.msra.mxu0 %v870
        %1032 = vmatprep.subr.bf16.mxu0 %v873
        %1033 = vmatpush1.bf16.msra.mxu0 %v872
        %1034 = vmatprep.subr.bf16.mxu0 %v875
        %1035 = vmatpush1.bf16.msra.mxu0 %v874
        %1036 = vmatprep.subr.bf16.mxu0 %v877
        %1037 = vmatpush1.bf16.msra.mxu0 %v876
        %1038 = vmatprep.subr.bf16.mxu0 %v879
        %1039 = vmatpush1.bf16.msra.mxu0 %v878
        %1040 = vmatprep.subr.bf16.mxu0 %v881
        %1041 = vmatpush1.bf16.msra.mxu0 %v880
        %1042 = vmatprep.subr.bf16.mxu0 %v883
        %1043 = vmatpush1.bf16.msra.mxu0 %v882
        %1044 = vmatprep.mubr.bf16.mxu0 %v597
        %1045 = vmatmul.mubr.bf16.gmra.mrb[0].mxu0 %v594
        %v1046 = vpop.f32.mrb[0].mxu0
        %v1047 = vadd.f32 0.0, %v1046
        %v1048 = vpop.f32.mrb[0].mxu0
        %v1049 = vadd.f32 0.0, %v1048
        %v1050 = vpop.f32.mrb[0].mxu0
        %v1051 = vadd.f32 0.0, %v1050
        %v1052 = vpop.f32.mrb[0].mxu0
        %v1053 = vadd.f32 0.0, %v1052
        %1054 = vdwg.mxu0
        %1055 = vmatprep.subr.bf16.mxu0 %v885
        %1056 = vmatpush1.bf16.msra.mxu0 %v884
        %1057 = vmatprep.subr.bf16.mxu0 %v887
        %1058 = vmatpush1.bf16.msra.mxu0 %v886
        %1059 = vmatprep.subr.bf16.mxu0 %v889
        %1060 = vmatpush1.bf16.msra.mxu0 %v888
        %1061 = vmatprep.subr.bf16.mxu0 %v891
        %1062 = vmatpush1.bf16.msra.mxu0 %v890
        %1063 = vmatprep.subr.bf16.mxu0 %v893
        %1064 = vmatpush1.bf16.msra.mxu0 %v892
        %1065 = vmatprep.subr.bf16.mxu0 %v895
        %1066 = vmatpush1.bf16.msra.mxu0 %v894
        %1067 = vmatprep.subr.bf16.mxu0 %v897
        %1068 = vmatpush1.bf16.msra.mxu0 %v896
        %1069 = vmatprep.subr.bf16.mxu0 %v899
        %1070 = vmatpush1.bf16.msra.mxu0 %v898
        %1071 = vmatprep.subr.bf16.mxu0 %v901
        %1072 = vmatpush1.bf16.msra.mxu0 %v900
        %1073 = vmatprep.subr.bf16.mxu0 %v903
        %1074 = vmatpush1.bf16.msra.mxu0 %v902
        %1075 = vmatprep.subr.bf16.mxu0 %v905
        %1076 = vmatpush1.bf16.msra.mxu0 %v904
        %1077 = vmatprep.subr.bf16.mxu0 %v907
        %1078 = vmatpush1.bf16.msra.mxu0 %v906
        %1079 = vmatprep.subr.bf16.mxu0 %v909
        %1080 = vmatpush1.bf16.msra.mxu0 %v908
        %1081 = vmatprep.subr.bf16.mxu0 %v911
        %1082 = vmatpush1.bf16.msra.mxu0 %v910
        %1083 = vmatprep.subr.bf16.mxu0 %v913
        %1084 = vmatpush1.bf16.msra.mxu0 %v912
        %1085 = vmatprep.subr.bf16.mxu0 %v915
        %1086 = vmatpush1.bf16.msra.mxu0 %v914
        %1087 = vmatprep.mubr.bf16.mxu0 %v603
        %1088 = vmatmul.mubr.bf16.gmra.mrb[0].mxu0 %v600
        %v1089 = vpop.f32.mrb[0].mxu0
        %v1090 = vadd.f32 %v1047, %v1089
        %v1091 = vpop.f32.mrb[0].mxu0
        %v1092 = vadd.f32 %v1049, %v1091
        %v1093 = vpop.f32.mrb[0].mxu0
        %v1094 = vadd.f32 %v1051, %v1093
        %v1095 = vpop.f32.mrb[0].mxu0
        %v1096 = vadd.f32 %v1053, %v1095
        %1097 = vdwg.mxu0
        %1098 = vmatprep.subr.bf16.mxu0 %v917
        %1099 = vmatpush1.bf16.msra.mxu0 %v916
        %1100 = vmatprep.subr.bf16.mxu0 %v919
        %1101 = vmatpush1.bf16.msra.mxu0 %v918
        %1102 = vmatprep.subr.bf16.mxu0 %v921
        %1103 = vmatpush1.bf16.msra.mxu0 %v920
        %1104 = vmatprep.subr.bf16.mxu0 %v923
        %1105 = vmatpush1.bf16.msra.mxu0 %v922
        %1106 = vmatprep.subr.bf16.mxu0 %v925
        %1107 = vmatpush1.bf16.msra.mxu0 %v924
        %1108 = vmatprep.subr.bf16.mxu0 %v927
        %1109 = vmatpush1.bf16.msra.mxu0 %v926
        %1110 = vmatprep.subr.bf16.mxu0 %v929
        %1111 = vmatpush1.bf16.msra.mxu0 %v928
        %1112 = vmatprep.subr.bf16.mxu0 %v931
        %1113 = vmatpush1.bf16.msra.mxu0 %v930
        %1114 = vmatprep.subr.bf16.mxu0 0
        %1115 = vmatpush1.bf16.msra.mxu0 0
        %1116 = vmatprep.subr.bf16.mxu0 0
        %1117 = vmatpush1.bf16.msra.mxu0 0
        %1118 = vmatprep.subr.bf16.mxu0 0
        %1119 = vmatpush1.bf16.msra.mxu0 0
        %1120 = vmatprep.subr.bf16.mxu0 0
        %1121 = vmatpush1.bf16.msra.mxu0 0
        %1122 = vmatprep.subr.bf16.mxu0 0
        %1123 = vmatpush1.bf16.msra.mxu0 0
        %1124 = vmatprep.subr.bf16.mxu0 0
        %1125 = vmatpush1.bf16.msra.mxu0 0
        %1126 = vmatprep.subr.bf16.mxu0 0
        %1127 = vmatpush1.bf16.msra.mxu0 0
        %1128 = vmatprep.subr.bf16.mxu0 0
        %1129 = vmatpush1.bf16.msra.mxu0 0
        %1130 = vmatprep.mubr.bf16.mxu0 0
        %1131 = vmatmul.mubr.bf16.gmra.mrb[0].mxu0 %v606
        %v1132 = vpop.f32.mrb[0].mxu0
        %v1133 = vadd.f32 %v1090, %v1132
        %v1134 = vpop.f32.mrb[0].mxu0
        %v1135 = vadd.f32 %v1092, %v1134
        %v1136 = vpop.f32.mrb[0].mxu0
        %v1137 = vadd.f32 %v1094, %v1136
        %v1138 = vpop.f32.mrb[0].mxu0
        %v1139 = vadd.f32 %v1096, %v1138
        %1140 = vdwg.mxu0
        %v1141 = vld [vmem:[%s4] sm:$0x3]
        %v1143 = vlaneseq
        %v1144 = vshrl.u32 %v1143, 7
        %v1145 = vsub.s32 0, %v1144
        %v1146 = vrot.slane %v1141, %v1145
        %v1147 = vlaneseq
        %v1148 = vshrl.u32 %v1147, 7
        %v1149 = vsub.s32 1, %v1148
        %v1150 = vrot.slane %v1141, %v1149
        %v1153 = vmul.f32 %v1133, %v1146
        %v1154 = vmul.f32 %v1135, %v1150
        %v1155 = vmul.f32 %v1137, %v1146
        %v1156 = vmul.f32 %v1139, %v1150
        %v1157 = vld [vmem:[%s5] sm:$0x3]
        %v1159 = vlaneseq
        %v1160 = vshrl.u32 %v1159, 7
        %v1161 = vsub.s32 0, %v1160
        %v1162 = vrot.slane %v1157, %v1161
        %v1163 = vlaneseq
        %v1164 = vshrl.u32 %v1163, 7
        %v1165 = vsub.s32 1, %v1164
        %v1166 = vrot.slane %v1157, %v1165
        %v1169 = vadd.f32 %v1153, %v1162
        %v1170 = vadd.f32 %v1154, %v1166
        %v1171 = vadd.f32 %v1155, %v1162
        %v1172 = vadd.f32 %v1156, %v1166
        %v1173 = vtanh.pop %v1169
        %v1174 = vtanh.pop %v1170
        %v1175 = vtanh.pop %v1171
        %v1176 = vtanh.pop %v1172
        %p1177 = scmp.le.s32.totalorder %s431, 40
        // Predicated region
        $region61: #{tpu_custom_call.1} parent=43 // pred_check
          %p1178 = pneg %p1177
        $region62: #{tpu_custom_call.1} parent=43 // pred_check_branch
          %1180 = sbr.rel (%p1178) target = $region64
        $region63: #{tpu_custom_call.1} parent=43 // pred_region
          %v1181 = vpack.c.bf16 %v1175, %v1173
          %v1182 = vpack.c.bf16 %v1176, %v1174
          %v1185 = vunpack.c.l.b16 %v1181
          %v1186 = vunpack.c.l.b16 %v1182
          %v1187 = vunpack.c.h.b16 %v1181
          %v1188 = vunpack.c.h.b16 %v1182
          %v1189 = vpack.c.b16 %v1186, %v1185
          %v1190 = vpack.c.b16 %v1188, %v1187
          %1193 = vst [vmem:[%s405] sm:$0xff] %v1189
          %1194 = vst [vmem:[%s405 + $0x8] sm:$0xff] %v1190
        $region64: #{tpu_custom_call.1} parent=43 // pred_fallthru
          _
        %p1195 = scmp.gt.s32.totalorder %s431, 40
        // Predicated region
        $region65: #{tpu_custom_call.1} parent=43 // pred_check
          %p1196 = pneg %p1195
        $region66: #{tpu_custom_call.1} parent=43 // pred_check_branch
          %1198 = sbr.rel (%p1196) target = $region68
        $region67: #{tpu_custom_call.1} parent=43 // pred_region
          %v1199 = vadd.s32 %v418, 8
          %v1200 = vstv %s420
          %v1201 = vadd.s32 %v418, %v1200
          %v1202 = vadd.s32 %v1199, %v1200
          %vm1203 = vcmp.lt.s32.totalorder %v1201, 40
          %vm1204 = vcmp.lt.s32.totalorder %v1202, 40
          %v1205 = vsel %vm1203, 1, 0
          %v1206 = vsel %vm1204, 1, 0
          %vm1207 = vcmp.eq.s32.totalorder %v1205, 1
          %vm1208 = vcmp.eq.s32.totalorder %v1206, 1
          %v1209 = vsel %vm1207, %v1173, 0.0
          %v1210 = vsel %vm1207, %v1174, 0.0
          %v1211 = vsel %vm1208, %v1175, 0.0
          %v1212 = vsel %vm1208, %v1176, 0.0
          %v1213 = vpack.c.bf16 %v1211, %v1209
          %v1214 = vpack.c.bf16 %v1212, %v1210
          %v1217 = vunpack.c.l.b16 %v1213
          %v1218 = vunpack.c.l.b16 %v1214
          %v1219 = vunpack.c.h.b16 %v1213
          %v1220 = vunpack.c.h.b16 %v1214
          %v1221 = vpack.c.b16 %v1218, %v1217
          %v1222 = vpack.c.b16 %v1220, %v1219
          %1225 = vst [vmem:[%s405] sm:$0xff] %v1221
          %1226 = vst [vmem:[%s405 + $0x8] sm:$0xff] %v1222
        $region68: #{tpu_custom_call.1} parent=43 // pred_fallthru
          _
        %s1227 = sand.u32 %s212, 1
        %s1228 = scalar_lea.sflag [#allocation5], %s1227
        %s1229 = sand.u32 %s212, 1
        %s1230 = smul.addr %s1229, 16
        %s1231 = scalar_lea.vmem [#allocation11], %s1230
        // Predicated region
        $region69: #{tpu_custom_call.1} parent=43 // pred_check
          %p1232 = pneg %p222
        $region70: #{tpu_custom_call.1} parent=43 // pred_check_branch
          %1234 = sbr.rel (%p1232) target = $region72
        $region71: #{tpu_custom_call.1} parent=43 // pred_region
          %s1235 = smul.u32 2, %s32
          %s1237 = ssub.s32 256, 256
          %1238 = vsyncadd %s1228, %s1237
          %s1239 = smul.addr %s1235, 2
          %s1240 = smul.addr %s31, 12
          %s1241 = sadd.s32 %s1239, %s1240
          %s1242 = smul.addr %s1241, 64
          %s1243 = scalar_lea.hbm %s6, %s1242
          %s1244 = sshll.u32 %s1231, 4
          %s1245 = int_to_ptr.vmem [resolvable:$true] %s1244
          %1250 = dma.vmem_to_hbm [thread:$0]  %s1245, 256, %s1243, %s1228, 128, 128, 8
        $region72: #{tpu_custom_call.1} parent=43 // pred_fallthru
          _
      $region44: #{tpu_custom_call.1} parent=5 // pred_fallthru
        _
      %p1251 = scmp.le.s32.totalorder 2, %s22
      // Predicated region
      $region73: #{tpu_custom_call.1} parent=5 // pred_check
        %p1252 = pneg %p1251
      $region74: #{tpu_custom_call.1} parent=5 // pred_check_branch
        %1254 = sbr.rel (%p1252) target = $region76
      $region75: #{tpu_custom_call.1} parent=5 // pred_region
        %s1255 = ssub.s32 %s22, 2
        // Predicated region
        $region77: #{tpu_custom_call.1} parent=75 // pred_check
          %p1256 = pneg %p228
        $region78: #{tpu_custom_call.1} parent=75 // pred_check_branch
          %1258 = sbr.rel (%p1256) target = $region80
        $region79: #{tpu_custom_call.1} parent=75 // pred_region
          %s1259 = sand.u32 %s213, 1
          %s1260 = scalar_lea.sflag [#allocation5], %s1259
          %s1261 = sand.u32 %s213, 1
          %s1262 = smul.addr %s1261, 16
          %s1263 = scalar_lea.vmem [#allocation11], %s1262
          %1264 = dma.done %s1260, 256
        $region80: #{tpu_custom_call.1} parent=75 // pred_fallthru
          _
      $region76: #{tpu_custom_call.1} parent=5 // pred_fallthru
        _
    $region6: #{tpu_custom_call.1} parent=1 // loop_footer
      %s26 = sadd.s32 1, %s22
    $region7: #{tpu_custom_call.1} parent=1 // loop_footer_branch
      %21 = sbr.rel target = $region3
    $region8: #{tpu_custom_call.1} parent=1 // loop_exit
      _
    %1265 = vsyncpa [#allocation4], 1
    %s1266 = scalar_lea.sflag [#allocation4], 1
    %1267 = vsyncpa %s1266, 1
    %1268 = vsyncpa [#allocation7], 1
    %s1269 = scalar_lea.sflag [#allocation7], 1
    %1270 = vsyncpa %s1269, 1
    %1271 = vsyncpa [#allocation10], 1
    %1272 = vsyncpa [#allocation5], 1
    %s1273 = scalar_lea.sflag [#allocation5], 1
    %1274 = vsyncpa %s1273, 1

</llo_original>
